<compile_context>
chip_gen: v6e
topology: v6e:2x2x1
jax: 0.10.0
libtpu: 0.0.40
codegen_flags: <defaults>
</compile_context>

<pallas_src>
import math
import functools

import jax
import jax.numpy as jnp
from jax import lax
from jax.experimental import pallas as pl
from jax.experimental.pallas import tpu as pltpu


def cls_head_kernel(x_ref, m_ref,
                    w1_ref, b1_ref, w2_ref, b2_ref, wc_ref, bc_ref,
                    out_ref, *, level_starts, level_ends):
    """One batch element; all FPN levels stacked along rows.

    Layout: time on sublanes, channels on lanes.
    x_ref : (1, T, Cin)   stacked (and padded) features
    m_ref : (1, T, 1)     validity mask (float)
    w*_ref: (3*C, Cout)   im2col-flattened conv weights, b*_ref: (1, Cout)
    out   : (1, T, 2*NC)  [sigmoid | fused sigmoid] packed along lanes
    """
    T = x_ref.shape[1]
    Cin = x_ref.shape[2]
    Cf = w1_ref.shape[1]
    NC = bc_ref.shape[1]

    x = x_ref[0]          # (T, Cin)
    m = m_ref[0]          # (T, 1)

    # ---- halo masks: built once, reused by all three conv layers ----
    row = lax.broadcasted_iota(jnp.int32, (T, 1), 0)
    is_start = row == level_starts[0]
    for s in level_starts[1:]:
        is_start = jnp.logical_or(is_start, row == s)
    is_end = row == level_ends[0]
    for e in level_ends[1:]:
        is_end = jnp.logical_or(is_end, row == e)
    prev_ok = jnp.where(is_start, 0.0, 1.0)      # (T, 1): row t-1 is same segment
    next_ok = jnp.where(is_end, 0.0, 1.0)        # (T, 1): row t+1 is same segment

    # Hoisted broadcasts (JAX does not CSE broadcast_in_dim).
    prev_in = jnp.broadcast_to(prev_ok, (T, Cin))
    next_in = jnp.broadcast_to(next_ok, (T, Cin))
    if Cf == Cin:
        prev_f, next_f = prev_in, next_in
    else:
        prev_f = jnp.broadcast_to(prev_ok, (T, Cf))
        next_f = jnp.broadcast_to(next_ok, (T, Cf))
    m_f = jnp.broadcast_to(m, (T, Cf))
    m_c = jnp.broadcast_to(m, (T, NC))

    def conv3(h, w_ref, b_ref, pmask, nmask):
        # k=3, pad=1 conv as a single im2col matmul:
        # rows are [h[t-1] | h[t] | h[t+1]] concatenated along lanes.
        hp = pltpu.roll(h, shift=1, axis=0) * pmask          # h[t-1], zero at seg start
        hn = pltpu.roll(h, shift=T - 1, axis=0) * nmask      # h[t+1] (non-negative shift)
        hcat = jnp.concatenate([hp, h, hn], axis=1)          # (T, 3*C)
        return jnp.dot(hcat, w_ref[...],
                       preferred_element_type=jnp.float32) + b_ref[...]

    # TODO(synk): bf16 matmul inputs (2x MXU on v6e/v7x) intentionally not used to
    # keep the exact f32 forward numerics of the PyTorch module.
    h = jnp.maximum(conv3(x, w1_ref, b1_ref, prev_in, next_in) * m_f, 0.0)
    h = jnp.maximum(conv3(h, w2_ref, b2_ref, prev_f, next_f) * m_f, 0.0)
    logits = conv3(h, wc_ref, bc_ref, prev_f, next_f) * m_c          # (T, NC)

    sig = jax.nn.sigmoid(logits)
    last = sig[:, NC - 1:NC]                                         # (T, 1)
    col = lax.broadcasted_iota(jnp.int32, (T, NC), 1)
    fuse = jnp.where(col == NC - 1, sig, sig * (1.0 - last))

    # Single packed output slab -> one output DMA stream.
    out_ref[0] = jnp.concatenate([sig, fuse], axis=1).astype(out_ref.dtype)


def cls_head_forward(fpn_feats, fpn_masks, params):
    """Fused forward over all FPN levels in one pallas_call.

    fpn_feats: list of (B, C, T_l) float32 (PyTorch NCW layout)
    fpn_masks: list of (B, 1, T_l) bool
    Returns (out_logits, out_logits_fuse): tuples of (B, T_l, NC) arrays.
    """
    w1, b1, w2, b2, wc, bc = params            # conv weights stored as (3, Cin, Cout)
    B = fpn_feats[0].shape[0]
    Cin = w1.shape[1]
    Cf = w2.shape[1]
    NC = wc.shape[2]
    level_lens = [int(f.shape[2]) for f in fpn_feats]
    Ttot = sum(level_lens)
    Tpad = max(8, -(-Ttot // 8) * 8)            # pad rows to a sublane multiple

    # Stack all levels along time (per batch) -> (B, Ttot, Cin), (B, Ttot, 1).
    x = jnp.concatenate([jnp.transpose(f, (0, 2, 1)) for f in fpn_feats], axis=1)
    m = jnp.concatenate(
        [jnp.transpose(mk, (0, 2, 1)).astype(jnp.float32) for mk in fpn_masks],
        axis=1)
    if Tpad > Ttot:
        x = jnp.pad(x, ((0, 0), (0, Tpad - Ttot), (0, 0)))
        m = jnp.pad(m, ((0, 0), (0, Tpad - Ttot), (0, 0)))

    # im2col weight layout: (3, Cin, Cout) -> (3*Cin, Cout).
    w1f = w1.reshape(3 * Cin, Cf)
    w2f = w2.reshape(3 * Cf, Cf)
    wcf = wc.reshape(3 * Cf, NC)

    # Static per-level boundary rows for the conv halo masks.
    starts, ends, off = [], [], 0
    for tl in level_lens:
        starts.append(off)
        ends.append(off + tl - 1)
        off += tl

    kernel = functools.partial(cls_head_kernel,
                               level_starts=tuple(starts),
                               level_ends=tuple(ends))

    flops = 2 * B * Tpad * (3 * Cin * Cf + 3 * Cf * Cf + 3 * Cf * NC)
    bytes_accessed = 4 * int(x.size + m.size + w1f.size + b1.size + w2f.size
                             + b2.size + wcf.size + bc.size + B * Tpad * 2 * NC)

    full2 = lambda b: (0, 0)
    per_b = lambda b: (b, 0, 0)

    out = pl.pallas_call(
        kernel,
        out_shape=jax.ShapeDtypeStruct((B, Tpad, 2 * NC), jnp.float32),
        grid=(B,),
        in_specs=[
            pl.BlockSpec((1, Tpad, Cin), per_b),
            pl.BlockSpec((1, Tpad, 1), per_b),
            pl.BlockSpec((3 * Cin, Cf), full2),
            pl.BlockSpec((1, Cf), full2),
            pl.BlockSpec((3 * Cf, Cf), full2),
            pl.BlockSpec((1, Cf), full2),
            pl.BlockSpec((3 * Cf, NC), full2),
            pl.BlockSpec((1, NC), full2),
        ],
        out_specs=pl.BlockSpec((1, Tpad, 2 * NC), per_b),
        compiler_params=pltpu.CompilerParams(
            dimension_semantics=("parallel",)),
        cost_estimate=pl.CostEstimate(
            flops=int(flops),
            transcendentals=int(B * Tpad * NC),
            bytes_accessed=bytes_accessed),
    )(x, m, w1f, b1, w2f, b2, wcf, bc)

    sig_all = out[:, :, :NC]
    fuse_all = out[:, :, NC:]
    out_logits, out_logits_fuse = [], []
    off = 0
    for tl in level_lens:
        out_logits.append(sig_all[:, off:off + tl, :])
        out_logits_fuse.append(fuse_all[:, off:off + tl, :])
        off += tl
    return tuple(out_logits), tuple(out_logits_fuse)


def ref_level(x_btc, mask_bt1, params):
    """Pure-JAX reference (same math as PyTorch conv1d k=3 pad=1)."""
    w1, b1, w2, b2, wc, bc = params

    def conv3(inp, w, b):
        xp = jnp.pad(inp, ((0, 0), (1, 1), (0, 0)))
        return xp[:, :-2] @ w[0] + xp[:, 1:-1] @ w[1] + xp[:, 2:] @ w[2] + b

    h = jnp.maximum(conv3(x_btc, w1, b1) * mask_bt1, 0.0)
    h = jnp.maximum(conv3(h, w2, b2) * mask_bt1, 0.0)
    logits = conv3(h, wc, bc) * mask_bt1
    sig = jax.nn.sigmoid(logits)
    last = sig[:, :, -1:]
    fuse = jnp.concatenate([sig[:, :, :-1] * (1.0 - last), last], axis=-1)
    return sig, fuse


def init_params(key, input_dim, feat_dim, num_classes, prior_prob=0.01):
    """Deterministic synthetic init. Conv weights stored as (K, Cin, Cout)."""
    ks = jax.random.split(key, 5)
    w1 = 0.1 * jax.random.normal(ks[0], (3, input_dim, feat_dim), jnp.float32)
    b1 = 0.1 * jax.random.normal(ks[1], (1, feat_dim), jnp.float32)
    w2 = 0.1 * jax.random.normal(ks[2], (3, feat_dim, feat_dim), jnp.float32)
    b2 = 0.1 * jax.random.normal(ks[3], (1, feat_dim), jnp.float32)
    wc = 0.1 * jax.random.normal(ks[4], (3, feat_dim, num_classes), jnp.float32)
    bias_value = -math.log((1.0 - prior_prob) / prior_prob)
    bc = jnp.full((1, num_classes), bias_value, jnp.float32)
    # TODO(synk): empty_cls bias override not exercised (empty_cls=[] default);
    # with_ln=True LayerNorm path also not exercised (with_ln=False default).
    return (w1, b1, w2, b2, wc, bc)


if __name__ == "__main__":
    # Full-precision f32 matmuls in the XLA reference so it matches the
    # in-kernel full-precision f32 MXU path tightly.
    jax.config.update("jax_default_matmul_precision", "highest")

    key = jax.random.PRNGKey(0)
    B, Cin, Cf, NC = 2, 32, 32, 8
    Ts = [16, 8]  # two FPN levels

    params = init_params(key, Cin, Cf, NC)

    # Build fpn_feats (PyTorch layout B, C, T) and boolean masks (B, 1, T).
    feats, masks = [], []
    for li, T in enumerate(Ts):
        kf, km, key = jax.random.split(key, 3)
        feats.append(jax.random.normal(kf, (B, Cin, T), jnp.float32))
        valid = jnp.arange(T)[None, :] < (T - 2 * li)  # a few masked-out tail positions
        masks.append(jnp.broadcast_to(valid[:, None, :], (B, 1, T)))

    out_logits, out_logits_fuse = cls_head_forward(feats, masks, params)
    out_logits = tuple(jax.block_until_ready(o) for o in out_logits)
    out_logits_fuse = tuple(jax.block_until_ready(o) for o in out_logits_fuse)

    # Correctness check vs pure-JAX reference, per level.
    for li, (feat_nct, mask_n1t) in enumerate(zip(feats, masks)):
        x_btc = jnp.transpose(feat_nct, (0, 2, 1))                       # (B, T, C)
        m_bt1 = jnp.transpose(mask_n1t, (0, 2, 1)).astype(jnp.float32)   # (B, T, 1)
        sig_ref, fuse_ref = ref_level(x_btc, m_bt1, params)
        if not (jnp.allclose(out_logits[li], sig_ref, atol=1e-4, rtol=1e-4)
                and jnp.allclose(out_logits_fuse[li], fuse_ref, atol=1e-4, rtol=1e-4)):
            raise AssertionError(
                f"Pallas kernel output mismatch vs reference at level {li}")

    print("KERNEL_OK")
</pallas_src>

<mosaic_0001>
module attributes {stable_mosaic.version = 11 : i64} {
  func.func @cls_head_kernel(%arg0: i32, %arg1: memref<1x24x32xf32, #tpu.memory_space<vmem>>, %arg2: memref<1x24x1xf32, #tpu.memory_space<vmem>>, %arg3: memref<96x32xf32, #tpu.memory_space<vmem>>, %arg4: memref<1x32xf32, #tpu.memory_space<vmem>>, %arg5: memref<96x32xf32, #tpu.memory_space<vmem>>, %arg6: memref<1x32xf32, #tpu.memory_space<vmem>>, %arg7: memref<96x8xf32, #tpu.memory_space<vmem>>, %arg8: memref<1x8xf32, #tpu.memory_space<vmem>>, %arg9: memref<1x24x16xf32, #tpu.memory_space<vmem>>) attributes {dimension_semantics = [#tpu.dimension_semantics<parallel>], iteration_bounds = array<i64: 2>, scalar_prefetch = 0 : i64, scratch_operands = 0 : i64, tpu.core_type = #tpu.core_type<tc>, window_params = [{transform_indices = @transform_0, window_bounds = array<i64: 1, 24, 32>}, {transform_indices = @transform_1, window_bounds = array<i64: 1, 24, 1>}, {pipeline_mode = #tpu.pipeline_mode<synchronous>, transform_indices = @transform_2, window_bounds = array<i64: 96, 32>}, {pipeline_mode = #tpu.pipeline_mode<synchronous>, transform_indices = @transform_3, window_bounds = array<i64: 1, 32>}, {pipeline_mode = #tpu.pipeline_mode<synchronous>, transform_indices = @transform_4, window_bounds = array<i64: 96, 32>}, {pipeline_mode = #tpu.pipeline_mode<synchronous>, transform_indices = @transform_5, window_bounds = array<i64: 1, 32>}, {pipeline_mode = #tpu.pipeline_mode<synchronous>, transform_indices = @transform_6, window_bounds = array<i64: 96, 8>}, {pipeline_mode = #tpu.pipeline_mode<synchronous>, transform_indices = @transform_7, window_bounds = array<i64: 1, 8>}, {transform_indices = @transform_8, window_bounds = array<i64: 1, 24, 16>}]} {
    %c0 = arith.constant 0 : index
    %c0_0 = arith.constant 0 : index
    %c0_1 = arith.constant 0 : index
    %0 = vector.load %arg1[%c0, %c0_0, %c0_1] : memref<1x24x32xf32, #tpu.memory_space<vmem>>, vector<1x24x32xf32>
    %1 = vector.shape_cast %0 : vector<1x24x32xf32> to vector<24x32xf32>
    %c0_2 = arith.constant 0 : index
    %c0_3 = arith.constant 0 : index
    %c0_4 = arith.constant 0 : index
    %2 = vector.load %arg2[%c0_2, %c0_3, %c0_4] : memref<1x24x1xf32, #tpu.memory_space<vmem>>, vector<1x24x1xf32>
    %3 = vector.shape_cast %2 : vector<1x24x1xf32> to vector<24x1xf32>
    %4 = tpu.iota {dimensions = array<i32: 0>} : vector<24x1xi32>
    %c0_i32 = arith.constant 0 : i32
    %5 = vector.broadcast %c0_i32 : i32 to vector<24x1xi32>
    %6 = arith.cmpi eq, %4, %5 : vector<24x1xi32>
    %c16_i32 = arith.constant 16 : i32
    %7 = vector.broadcast %c16_i32 : i32 to vector<24x1xi32>
    %8 = arith.cmpi eq, %4, %7 : vector<24x1xi32>
    %9 = arith.ori %6, %8 : vector<24x1xi1>
    %c15_i32 = arith.constant 15 : i32
    %10 = vector.broadcast %c15_i32 : i32 to vector<24x1xi32>
    %11 = arith.cmpi eq, %4, %10 : vector<24x1xi32>
    %c23_i32 = arith.constant 23 : i32
    %12 = vector.broadcast %c23_i32 : i32 to vector<24x1xi32>
    %13 = arith.cmpi eq, %4, %12 : vector<24x1xi32>
    %14 = arith.ori %11, %13 : vector<24x1xi1>
    %cst = arith.constant 0.000000e+00 : f32
    %cst_5 = arith.constant 1.000000e+00 : f32
    %15 = vector.broadcast %cst : f32 to vector<24x1xf32>
    %16 = vector.broadcast %cst_5 : f32 to vector<24x1xf32>
    %17 = arith.select %9, %15, %16 : vector<24x1xi1>, vector<24x1xf32>
    %cst_6 = arith.constant 0.000000e+00 : f32
    %cst_7 = arith.constant 1.000000e+00 : f32
    %18 = vector.broadcast %cst_6 : f32 to vector<24x1xf32>
    %19 = vector.broadcast %cst_7 : f32 to vector<24x1xf32>
    %20 = arith.select %14, %18, %19 : vector<24x1xi1>, vector<24x1xf32>
    %21 = vector.shape_cast %17 : vector<24x1xf32> to vector<24x1xf32>
    %22 = vector.broadcast %21 : vector<24x1xf32> to vector<24x32xf32>
    %23 = vector.shape_cast %20 : vector<24x1xf32> to vector<24x1xf32>
    %24 = vector.broadcast %23 : vector<24x1xf32> to vector<24x32xf32>
    %25 = vector.shape_cast %3 : vector<24x1xf32> to vector<24x1xf32>
    %26 = vector.broadcast %25 : vector<24x1xf32> to vector<24x32xf32>
    %27 = vector.shape_cast %3 : vector<24x1xf32> to vector<24x1xf32>
    %28 = vector.broadcast %27 : vector<24x1xf32> to vector<24x8xf32>
    %c1_i32 = arith.constant 1 : i32
    %29 = tpu.dynamic_rotate %1 by %c1_i32 dim 0 : vector<24x32xf32>, i32 -> vector<24x32xf32>
    %30 = arith.mulf %29, %22 : vector<24x32xf32>
    %c23_i32_8 = arith.constant 23 : i32
    %31 = tpu.dynamic_rotate %1 by %c23_i32_8 dim 0 : vector<24x32xf32>, i32 -> vector<24x32xf32>
    %32 = arith.mulf %31, %24 : vector<24x32xf32>
    %33 = tpu.concatenate %30, %1, %32 in 1 : vector<24x32xf32>, vector<24x32xf32>, vector<24x32xf32> -> vector<24x96xf32>
    %c0_9 = arith.constant 0 : index
    %c0_10 = arith.constant 0 : index
    %34 = vector.load %arg3[%c0_9, %c0_10] : memref<96x32xf32, #tpu.memory_space<vmem>>, vector<96x32xf32>
    %cst_11 = arith.constant dense<0.000000e+00> : vector<24x32xf32>
    %35 = tpu.matmul %33, %34, %cst_11 {dimension_numbers = #tpu.dot_dimension_numbers<[1], [0], [0], [1], [0, 0, 1, 1], [], []>, precision = #tpu.contract_precision<fp32>} : vector<24x96xf32>, vector<96x32xf32>, vector<24x32xf32> -> vector<24x32xf32>
    %c0_12 = arith.constant 0 : index
    %c0_13 = arith.constant 0 : index
    %36 = vector.load %arg4[%c0_12, %c0_13] : memref<1x32xf32, #tpu.memory_space<vmem>>, vector<1x32xf32>
    %37 = vector.broadcast %36 : vector<1x32xf32> to vector<24x32xf32>
    %38 = arith.addf %35, %37 : vector<24x32xf32>
    %39 = arith.mulf %38, %26 : vector<24x32xf32>
    %cst_14 = arith.constant 0.000000e+00 : f32
    %40 = vector.broadcast %cst_14 : f32 to vector<24x32xf32>
    %41 = arith.maximumf %39, %40 : vector<24x32xf32>
    %c1_i32_15 = arith.constant 1 : i32
    %42 = tpu.dynamic_rotate %41 by %c1_i32_15 dim 0 : vector<24x32xf32>, i32 -> vector<24x32xf32>
    %43 = arith.mulf %42, %22 : vector<24x32xf32>
    %c23_i32_16 = arith.constant 23 : i32
    %44 = tpu.dynamic_rotate %41 by %c23_i32_16 dim 0 : vector<24x32xf32>, i32 -> vector<24x32xf32>
    %45 = arith.mulf %44, %24 : vector<24x32xf32>
    %46 = tpu.concatenate %43, %41, %45 in 1 : vector<24x32xf32>, vector<24x32xf32>, vector<24x32xf32> -> vector<24x96xf32>
    %c0_17 = arith.constant 0 : index
    %c0_18 = arith.constant 0 : index
    %47 = vector.load %arg5[%c0_17, %c0_18] : memref<96x32xf32, #tpu.memory_space<vmem>>, vector<96x32xf32>
    %cst_19 = arith.constant dense<0.000000e+00> : vector<24x32xf32>
    %48 = tpu.matmul %46, %47, %cst_19 {dimension_numbers = #tpu.dot_dimension_numbers<[1], [0], [0], [1], [0, 0, 1, 1], [], []>, precision = #tpu.contract_precision<fp32>} : vector<24x96xf32>, vector<96x32xf32>, vector<24x32xf32> -> vector<24x32xf32>
    %c0_20 = arith.constant 0 : index
    %c0_21 = arith.constant 0 : index
    %49 = vector.load %arg6[%c0_20, %c0_21] : memref<1x32xf32, #tpu.memory_space<vmem>>, vector<1x32xf32>
    %50 = vector.broadcast %49 : vector<1x32xf32> to vector<24x32xf32>
    %51 = arith.addf %48, %50 : vector<24x32xf32>
    %52 = arith.mulf %51, %26 : vector<24x32xf32>
    %cst_22 = arith.constant 0.000000e+00 : f32
    %53 = vector.broadcast %cst_22 : f32 to vector<24x32xf32>
    %54 = arith.maximumf %52, %53 : vector<24x32xf32>
    %c1_i32_23 = arith.constant 1 : i32
    %55 = tpu.dynamic_rotate %54 by %c1_i32_23 dim 0 : vector<24x32xf32>, i32 -> vector<24x32xf32>
    %56 = arith.mulf %55, %22 : vector<24x32xf32>
    %c23_i32_24 = arith.constant 23 : i32
    %57 = tpu.dynamic_rotate %54 by %c23_i32_24 dim 0 : vector<24x32xf32>, i32 -> vector<24x32xf32>
    %58 = arith.mulf %57, %24 : vector<24x32xf32>
    %59 = tpu.concatenate %56, %54, %58 in 1 : vector<24x32xf32>, vector<24x32xf32>, vector<24x32xf32> -> vector<24x96xf32>
    %c0_25 = arith.constant 0 : index
    %c0_26 = arith.constant 0 : index
    %60 = vector.load %arg7[%c0_25, %c0_26] : memref<96x8xf32, #tpu.memory_space<vmem>>, vector<96x8xf32>
    %cst_27 = arith.constant dense<0.000000e+00> : vector<24x8xf32>
    %61 = tpu.matmul %59, %60, %cst_27 {dimension_numbers = #tpu.dot_dimension_numbers<[1], [0], [0], [1], [0, 0, 1, 1], [], []>, precision = #tpu.contract_precision<fp32>} : vector<24x96xf32>, vector<96x8xf32>, vector<24x8xf32> -> vector<24x8xf32>
    %c0_28 = arith.constant 0 : index
    %c0_29 = arith.constant 0 : index
    %62 = vector.load %arg8[%c0_28, %c0_29] : memref<1x8xf32, #tpu.memory_space<vmem>>, vector<1x8xf32>
    %63 = vector.broadcast %62 : vector<1x8xf32> to vector<24x8xf32>
    %64 = arith.addf %61, %63 : vector<24x8xf32>
    %65 = arith.mulf %64, %28 : vector<24x8xf32>
    %66 = arith.negf %65 : vector<24x8xf32>
    %67 = math.exp %66 : vector<24x8xf32>
    %cst_30 = arith.constant 1.000000e+00 : f32
    %68 = vector.broadcast %cst_30 : f32 to vector<24x8xf32>
    %69 = arith.addf %68, %67 : vector<24x8xf32>
    %70 = arith.divf %68, %69 : vector<24x8xf32>
    %71 = vector.extract_strided_slice %70 {offsets = [0, 7], sizes = [24, 1], strides = [1, 1]} : vector<24x8xf32> to vector<24x1xf32>
    %72 = tpu.iota {dimensions = array<i32: 1>} : vector<24x8xi32>
    %c7_i32 = arith.constant 7 : i32
    %73 = vector.broadcast %c7_i32 : i32 to vector<24x8xi32>
    %74 = arith.cmpi eq, %72, %73 : vector<24x8xi32>
    %cst_31 = arith.constant 1.000000e+00 : f32
    %75 = vector.broadcast %cst_31 : f32 to vector<24x1xf32>
    %76 = arith.subf %75, %71 : vector<24x1xf32>
    %77 = vector.broadcast %76 : vector<24x1xf32> to vector<24x8xf32>
    %78 = arith.mulf %70, %77 : vector<24x8xf32>
    %79 = arith.select %74, %70, %78 : vector<24x8xi1>, vector<24x8xf32>
    %80 = tpu.concatenate %70, %79 in 1 : vector<24x8xf32>, vector<24x8xf32> -> vector<24x16xf32>
    %c0_32 = arith.constant 0 : index
    %c0_33 = arith.constant 0 : index
    %c0_34 = arith.constant 0 : index
    %81 = vector.load %arg9[%c0_32, %c0_33, %c0_34] : memref<1x24x16xf32, #tpu.memory_space<vmem>>, vector<1x24x16xf32>
    %82 = vector.shape_cast %81 : vector<1x24x16xf32> to vector<24x16xf32>
    %83 = vector.shape_cast %80 : vector<24x16xf32> to vector<1x24x16xf32>
    tpu.vector_store %arg9[%c0_32, %c0_33, %c0_34], %83 {strides = array<i32>} : memref<1x24x16xf32, #tpu.memory_space<vmem>>, vector<1x24x16xf32>,
    return
  }
  func.func @transform_0(%arg0: i32) -> (i32, i32, i32) {
    %c0_i32 = arith.constant 0 : i32
    %c0_i32_0 = arith.constant 0 : i32
    %c0_i32_1 = arith.constant 0 : i32
    return %arg0, %c0_i32, %c0_i32_0 : i32, i32, i32
  }
  func.func @transform_1(%arg0: i32) -> (i32, i32, i32) {
    %c0_i32 = arith.constant 0 : i32
    %c0_i32_0 = arith.constant 0 : i32
    %c0_i32_1 = arith.constant 0 : i32
    return %arg0, %c0_i32, %c0_i32_0 : i32, i32, i32
  }
  func.func @transform_2(%arg0: i32) -> (i32, i32) {
    %c0_i32 = arith.constant 0 : i32
    %c0_i32_0 = arith.constant 0 : i32
    %c0_i32_1 = arith.constant 0 : i32
    return %c0_i32, %c0_i32_0 : i32, i32
  }
  func.func @transform_3(%arg0: i32) -> (i32, i32) {
    %c0_i32 = arith.constant 0 : i32
    %c0_i32_0 = arith.constant 0 : i32
    %c0_i32_1 = arith.constant 0 : i32
    return %c0_i32, %c0_i32_0 : i32, i32
  }
  func.func @transform_4(%arg0: i32) -> (i32, i32) {
    %c0_i32 = arith.constant 0 : i32
    %c0_i32_0 = arith.constant 0 : i32
    %c0_i32_1 = arith.constant 0 : i32
    return %c0_i32, %c0_i32_0 : i32, i32
  }
  func.func @transform_5(%arg0: i32) -> (i32, i32) {
    %c0_i32 = arith.constant 0 : i32
    %c0_i32_0 = arith.constant 0 : i32
    %c0_i32_1 = arith.constant 0 : i32
    return %c0_i32, %c0_i32_0 : i32, i32
  }
  func.func @transform_6(%arg0: i32) -> (i32, i32) {
    %c0_i32 = arith.constant 0 : i32
    %c0_i32_0 = arith.constant 0 : i32
    %c0_i32_1 = arith.constant 0 : i32
    return %c0_i32, %c0_i32_0 : i32, i32
  }
  func.func @transform_7(%arg0: i32) -> (i32, i32) {
    %c0_i32 = arith.constant 0 : i32
    %c0_i32_0 = arith.constant 0 : i32
    %c0_i32_1 = arith.constant 0 : i32
    return %c0_i32, %c0_i32_0 : i32, i32
  }
  func.func @transform_8(%arg0: i32) -> (i32, i32, i32) {
    %c0_i32 = arith.constant 0 : i32
    %c0_i32_0 = arith.constant 0 : i32
    %c0_i32_1 = arith.constant 0 : i32
    return %arg0, %c0_i32, %c0_i32_0 : i32, i32, i32
  }
}

</mosaic_0001>

<llo_original>
// kernel: tpu_custom_call.1
$region0: #{tpu_custom_call.1}
  #allocation0 [shape = 'u32[]', space=smem, size = 0x4, offset = 0x4, fixed_abs, tag = 'smem constant byte address 0x4 - core index']
  #allocation1 [shape = 'u32[144,128]{1,0:T(1,128)}', space=vmem, size = 0x12000, scoped, tag = 'internal scratch']
  %s0 = inlined_call_operand.vmem [shape: f32[2,24,32], index: 0, kind: input, shape index: {}]
  %s1 = inlined_call_operand.vmem [shape: f32[2,24,1], index: 1, kind: input, shape index: {}]
  %s2 = inlined_call_operand.vmem [shape: f32[96,32], index: 2, kind: input, shape index: {}]
  %s3 = inlined_call_operand.vmem [shape: f32[1,32], index: 3, kind: input, shape index: {}]
  %s4 = inlined_call_operand.vmem [shape: f32[96,32], index: 4, kind: input, shape index: {}]
  %s5 = inlined_call_operand.vmem [shape: f32[1,32], index: 5, kind: input, shape index: {}]
  %s6 = inlined_call_operand.vmem [shape: f32[96,8], index: 6, kind: input, shape index: {}]
  %s7 = inlined_call_operand.vmem [shape: f32[1,8], index: 7, kind: input, shape index: {}]
  %s8 = inlined_call_operand.vmem [shape: f32[2,24,16], index: 8, kind: output, shape index: {}]
  %s9 = sld [smem:[#allocation0]]
  $region65: #{tpu_custom_call.1} parent=0
    _
  %s11 = ssub.s32 1, %s9
  %s12 = scalar_select 0, %s11, %s9
  loop: start=0, step=1, limit=4
  $region2: #{tpu_custom_call.1} parent=0 // loop_pre_header
    _
  $region3: #{tpu_custom_call.1} parent=0 // loop_header
    %s14 = sphi 0, %s18
    %p15 = scmp.ge.s32.totalorder %s14, 4
    %s24 = sphi 0, %s26
    %s27 = sphi 0, %s24
    %s28 = sphi 0, %s27
    %s44 = sphi 0, %s28
    %s50 = sphi 0, %s52
    %s53 = sphi 0, %s50
    %s54 = sphi 0, %s53
    %s70 = sphi 0, %s54
    %s74 = sphi 0, %s74
    %s76 = sphi 0, %s74
    %s77 = sphi 0, %s76
    %s91 = sphi 0, %s77
    %s95 = sphi 0, %s95
    %s97 = sphi 0, %s95
    %s98 = sphi 0, %s97
    %s112 = sphi 0, %s98
    %s116 = sphi 0, %s116
    %s118 = sphi 0, %s116
    %s119 = sphi 0, %s118
    %s133 = sphi 0, %s119
    %s137 = sphi 0, %s137
    %s139 = sphi 0, %s137
    %s140 = sphi 0, %s139
    %s154 = sphi 0, %s140
    %s158 = sphi 0, %s158
    %s160 = sphi 0, %s158
    %s161 = sphi 0, %s160
    %s175 = sphi 0, %s161
    %s179 = sphi 0, %s179
    %s181 = sphi 0, %s179
    %s182 = sphi 0, %s181
    %s196 = sphi 0, %s182
    %s202 = sphi 0, %s204
    %s205 = sphi 0, %s202
    %s206 = sphi 0, %s205
    %s222 = sphi 0, %s206
  $region4: #{tpu_custom_call.1} parent=0 // loop_header_branch
    %17 = sbr.rel (%p15) target = $region8
  $region5: #{tpu_custom_call.1} parent=0 // loop_body
    %s19 = ssub.s32 %s14, 1
    %s20 = ssub.s32 %s14, 2
    %s21 = sadd.s32 %s14, 1
    %s22 = ssub.s32 %s14, %s21
    %p23 = scmp.eq.s32.totalorder %s22, 0
    %s25 = sadd.s32 %s24, 1
    %s26 = scalar_select %p23, %s24, %s25
    %p29 = pneg %p23
    %p30 = scmp.eq.s32.totalorder %s14, 1
    %p31 = por %p29, %p30
    %p32 = scmp.ne.s32.totalorder %s24, %s27
    %p33 = scmp.eq.s32.totalorder %s14, 0
    %p34 = por %p32, %p33
    %p35 = scmp.ne.s32.totalorder %s24, %s27
    %p36 = scmp.eq.s32.totalorder %s19, 1
    %p37 = por %p35, %p36
    %p38 = scmp.ne.s32.totalorder %s27, %s28
    %p39 = scmp.eq.s32.totalorder %s19, 0
    %p40 = por %p38, %p39
    %p41 = scmp.ne.s32.totalorder %s27, %s28
    %p42 = scmp.eq.s32.totalorder %s20, 1
    %p43 = por %p41, %p42
    %p45 = scmp.ne.s32.totalorder %s28, %s44
    %p46 = scmp.eq.s32.totalorder %s20, 0
    %p47 = por %p45, %p46
    %s48 = ssub.s32 %s14, %s21
    %p49 = scmp.eq.s32.totalorder %s48, 0
    %s51 = sadd.s32 %s50, 1
    %s52 = scalar_select %p49, %s50, %s51
    %p55 = pneg %p49
    %p56 = scmp.eq.s32.totalorder %s14, 1
    %p57 = por %p55, %p56
    %p58 = scmp.ne.s32.totalorder %s50, %s53
    %p59 = scmp.eq.s32.totalorder %s14, 0
    %p60 = por %p58, %p59
    %p61 = scmp.ne.s32.totalorder %s50, %s53
    %p62 = scmp.eq.s32.totalorder %s19, 1
    %p63 = por %p61, %p62
    %p64 = scmp.ne.s32.totalorder %s53, %s54
    %p65 = scmp.eq.s32.totalorder %s19, 0
    %p66 = por %p64, %p65
    %p67 = scmp.ne.s32.totalorder %s53, %s54
    %p68 = scmp.eq.s32.totalorder %s20, 1
    %p69 = por %p67, %p68
    %p71 = scmp.ne.s32.totalorder %s54, %s70
    %p72 = scmp.eq.s32.totalorder %s20, 0
    %p73 = por %p71, %p72
    %s75 = sadd.s32 %s74, 1
    %p78 = scmp.eq.s32.totalorder %s14, 1
    %p79 = scmp.ne.s32.totalorder %s74, %s76
    %p80 = scmp.eq.s32.totalorder %s14, 0
    %p81 = por %p79, %p80
    %p82 = scmp.ne.s32.totalorder %s74, %s76
    %p83 = scmp.eq.s32.totalorder %s19, 1
    %p84 = por %p82, %p83
    %p85 = scmp.ne.s32.totalorder %s76, %s77
    %p86 = scmp.eq.s32.totalorder %s19, 0
    %p87 = por %p85, %p86
    %p88 = scmp.ne.s32.totalorder %s76, %s77
    %p89 = scmp.eq.s32.totalorder %s20, 1
    %p90 = por %p88, %p89
    %p92 = scmp.ne.s32.totalorder %s77, %s91
    %p93 = scmp.eq.s32.totalorder %s20, 0
    %p94 = por %p92, %p93
    %s96 = sadd.s32 %s95, 1
    %p99 = scmp.eq.s32.totalorder %s14, 1
    %p100 = scmp.ne.s32.totalorder %s95, %s97
    %p101 = scmp.eq.s32.totalorder %s14, 0
    %p102 = por %p100, %p101
    %p103 = scmp.ne.s32.totalorder %s95, %s97
    %p104 = scmp.eq.s32.totalorder %s19, 1
    %p105 = por %p103, %p104
    %p106 = scmp.ne.s32.totalorder %s97, %s98
    %p107 = scmp.eq.s32.totalorder %s19, 0
    %p108 = por %p106, %p107
    %p109 = scmp.ne.s32.totalorder %s97, %s98
    %p110 = scmp.eq.s32.totalorder %s20, 1
    %p111 = por %p109, %p110
    %p113 = scmp.ne.s32.totalorder %s98, %s112
    %p114 = scmp.eq.s32.totalorder %s20, 0
    %p115 = por %p113, %p114
    %s117 = sadd.s32 %s116, 1
    %p120 = scmp.eq.s32.totalorder %s14, 1
    %p121 = scmp.ne.s32.totalorder %s116, %s118
    %p122 = scmp.eq.s32.totalorder %s14, 0
    %p123 = por %p121, %p122
    %p124 = scmp.ne.s32.totalorder %s116, %s118
    %p125 = scmp.eq.s32.totalorder %s19, 1
    %p126 = por %p124, %p125
    %p127 = scmp.ne.s32.totalorder %s118, %s119
    %p128 = scmp.eq.s32.totalorder %s19, 0
    %p129 = por %p127, %p128
    %p130 = scmp.ne.s32.totalorder %s118, %s119
    %p131 = scmp.eq.s32.totalorder %s20, 1
    %p132 = por %p130, %p131
    %p134 = scmp.ne.s32.totalorder %s119, %s133
    %p135 = scmp.eq.s32.totalorder %s20, 0
    %p136 = por %p134, %p135
    %s138 = sadd.s32 %s137, 1
    %p141 = scmp.eq.s32.totalorder %s14, 1
    %p142 = scmp.ne.s32.totalorder %s137, %s139
    %p143 = scmp.eq.s32.totalorder %s14, 0
    %p144 = por %p142, %p143
    %p145 = scmp.ne.s32.totalorder %s137, %s139
    %p146 = scmp.eq.s32.totalorder %s19, 1
    %p147 = por %p145, %p146
    %p148 = scmp.ne.s32.totalorder %s139, %s140
    %p149 = scmp.eq.s32.totalorder %s19, 0
    %p150 = por %p148, %p149
    %p151 = scmp.ne.s32.totalorder %s139, %s140
    %p152 = scmp.eq.s32.totalorder %s20, 1
    %p153 = por %p151, %p152
    %p155 = scmp.ne.s32.totalorder %s140, %s154
    %p156 = scmp.eq.s32.totalorder %s20, 0
    %p157 = por %p155, %p156
    %s159 = sadd.s32 %s158, 1
    %p162 = scmp.eq.s32.totalorder %s14, 1
    %p163 = scmp.ne.s32.totalorder %s158, %s160
    %p164 = scmp.eq.s32.totalorder %s14, 0
    %p165 = por %p163, %p164
    %p166 = scmp.ne.s32.totalorder %s158, %s160
    %p167 = scmp.eq.s32.totalorder %s19, 1
    %p168 = por %p166, %p167
    %p169 = scmp.ne.s32.totalorder %s160, %s161
    %p170 = scmp.eq.s32.totalorder %s19, 0
    %p171 = por %p169, %p170
    %p172 = scmp.ne.s32.totalorder %s160, %s161
    %p173 = scmp.eq.s32.totalorder %s20, 1
    %p174 = por %p172, %p173
    %p176 = scmp.ne.s32.totalorder %s161, %s175
    %p177 = scmp.eq.s32.totalorder %s20, 0
    %p178 = por %p176, %p177
    %s180 = sadd.s32 %s179, 1
    %p183 = scmp.eq.s32.totalorder %s14, 1
    %p184 = scmp.ne.s32.totalorder %s179, %s181
    %p185 = scmp.eq.s32.totalorder %s14, 0
    %p186 = por %p184, %p185
    %p187 = scmp.ne.s32.totalorder %s179, %s181
    %p188 = scmp.eq.s32.totalorder %s19, 1
    %p189 = por %p187, %p188
    %p190 = scmp.ne.s32.totalorder %s181, %s182
    %p191 = scmp.eq.s32.totalorder %s19, 0
    %p192 = por %p190, %p191
    %p193 = scmp.ne.s32.totalorder %s181, %s182
    %p194 = scmp.eq.s32.totalorder %s20, 1
    %p195 = por %p193, %p194
    %p197 = scmp.ne.s32.totalorder %s182, %s196
    %p198 = scmp.eq.s32.totalorder %s20, 0
    %p199 = por %p197, %p198
    %s200 = ssub.s32 %s14, %s21
    %p201 = scmp.eq.s32.totalorder %s200, 0
    %s203 = sadd.s32 %s202, 1
    %s204 = scalar_select %p201, %s202, %s203
    %p207 = pneg %p201
    %p208 = scmp.eq.s32.totalorder %s14, 1
    %p209 = por %p207, %p208
    %p210 = scmp.ne.s32.totalorder %s202, %s205
    %p211 = scmp.eq.s32.totalorder %s14, 0
    %p212 = por %p210, %p211
    %p213 = scmp.ne.s32.totalorder %s202, %s205
    %p214 = scmp.eq.s32.totalorder %s19, 1
    %p215 = por %p213, %p214
    %p216 = scmp.ne.s32.totalorder %s205, %s206
    %p217 = scmp.eq.s32.totalorder %s19, 0
    %p218 = por %p216, %p217
    %p219 = scmp.ne.s32.totalorder %s205, %s206
    %p220 = scmp.eq.s32.totalorder %s20, 1
    %p221 = por %p219, %p220
    %p223 = scmp.ne.s32.totalorder %s206, %s222
    %p224 = scmp.eq.s32.totalorder %s20, 0
    %p225 = por %p223, %p224
    %p226 = scmp.le.s32.totalorder 1, %s14
    %p227 = scmp.lt.s32.totalorder %s14, 3
    %p228 = pnand %p226, %p227
    %p229 = pneg %p228
    // Predicated region
    $region9: #{tpu_custom_call.1} parent=5 // pred_check
      _
    $region10: #{tpu_custom_call.1} parent=5 // pred_check_branch
      %231 = sbr.rel (%p228) target = $region12
    $region11: #{tpu_custom_call.1} parent=5 // pred_region
      %s232 = ssub.s32 %s14, 1
      // Predicated region
      $region13: #{tpu_custom_call.1} parent=11 // pred_check
        %p233 = pneg %p87
      $region14: #{tpu_custom_call.1} parent=11 // pred_check_branch
        %235 = sbr.rel (%p233) target = $region16
      $region15: #{tpu_custom_call.1} parent=11 // pred_region
        _
      $region16: #{tpu_custom_call.1} parent=11 // pred_fallthru
        _
      // Predicated region
      $region17: #{tpu_custom_call.1} parent=11 // pred_check
        %p236 = pneg %p108
      $region18: #{tpu_custom_call.1} parent=11 // pred_check_branch
        %238 = sbr.rel (%p236) target = $region20
      $region19: #{tpu_custom_call.1} parent=11 // pred_region
        _
      $region20: #{tpu_custom_call.1} parent=11 // pred_fallthru
        _
      // Predicated region
      $region21: #{tpu_custom_call.1} parent=11 // pred_check
        %p239 = pneg %p129
      $region22: #{tpu_custom_call.1} parent=11 // pred_check_branch
        %241 = sbr.rel (%p239) target = $region24
      $region23: #{tpu_custom_call.1} parent=11 // pred_region
        _
      $region24: #{tpu_custom_call.1} parent=11 // pred_fallthru
        _
      // Predicated region
      $region25: #{tpu_custom_call.1} parent=11 // pred_check
        %p242 = pneg %p150
      $region26: #{tpu_custom_call.1} parent=11 // pred_check_branch
        %244 = sbr.rel (%p242) target = $region28
      $region27: #{tpu_custom_call.1} parent=11 // pred_region
        _
      $region28: #{tpu_custom_call.1} parent=11 // pred_fallthru
        _
      // Predicated region
      $region29: #{tpu_custom_call.1} parent=11 // pred_check
        %p245 = pneg %p171
      $region30: #{tpu_custom_call.1} parent=11 // pred_check_branch
        %247 = sbr.rel (%p245) target = $region32
      $region31: #{tpu_custom_call.1} parent=11 // pred_region
        _
      $region32: #{tpu_custom_call.1} parent=11 // pred_fallthru
        _
      // Predicated region
      $region33: #{tpu_custom_call.1} parent=11 // pred_check
        %p248 = pneg %p192
      $region34: #{tpu_custom_call.1} parent=11 // pred_check_branch
        %250 = sbr.rel (%p248) target = $region36
      $region35: #{tpu_custom_call.1} parent=11 // pred_region
        _
      $region36: #{tpu_custom_call.1} parent=11 // pred_fallthru
        _
    $region12: #{tpu_custom_call.1} parent=5 // pred_fallthru
      _
    %p251 = scmp.lt.s32.totalorder %s14, 2
    // Predicated region
    $region37: #{tpu_custom_call.1} parent=5 // pred_check
      %p252 = pneg %p251
    $region38: #{tpu_custom_call.1} parent=5 // pred_check_branch
      %254 = sbr.rel (%p252) target = $region40
    $region39: #{tpu_custom_call.1} parent=5 // pred_region
      // Predicated region
      $region41: #{tpu_custom_call.1} parent=39 // pred_check
        %p255 = pneg %p34
      $region42: #{tpu_custom_call.1} parent=39 // pred_check_branch
        %257 = sbr.rel (%p255) target = $region44
      $region43: #{tpu_custom_call.1} parent=39 // pred_region
        %p258 = scmp.lt.s32.totalorder %s14, 1
        %s259 = scalar_select %p258, %s14, 1
        %s260 = smul.addr %s259, 3
        %s261 = smul.addr %s260, 8
        %s262 = scalar_lea.vmem %s0, %s261
      $region44: #{tpu_custom_call.1} parent=39 // pred_fallthru
        _
      // Predicated region
      $region45: #{tpu_custom_call.1} parent=39 // pred_check
        %p263 = pneg %p60
      $region46: #{tpu_custom_call.1} parent=39 // pred_check_branch
        %265 = sbr.rel (%p263) target = $region48
      $region47: #{tpu_custom_call.1} parent=39 // pred_region
        %p266 = scmp.lt.s32.totalorder %s14, 1
        %s267 = scalar_select %p266, %s14, 1
        %s268 = smul.addr %s267, 3
        %s269 = smul.addr %s268, 8
        %s270 = scalar_lea.vmem %s1, %s269
      $region48: #{tpu_custom_call.1} parent=39 // pred_fallthru
        _
    $region40: #{tpu_custom_call.1} parent=5 // pred_fallthru
      _
    %p271 = scmp.le.s32.totalorder 1, %s14
    %p272 = scmp.lt.s32.totalorder %s14, 3
    %p273 = pnand %p271, %p272
    %p274 = pneg %p273
    // Predicated region
    $region49: #{tpu_custom_call.1} parent=5 // pred_check
      _
    $region50: #{tpu_custom_call.1} parent=5 // pred_check_branch
      %276 = sbr.rel (%p273) target = $region52
    $region51: #{tpu_custom_call.1} parent=5 // pred_region
      %s277 = ssub.s32 %s14, 1
      %p278 = scmp.lt.s32.totalorder %s19, 1
      %s279 = scalar_select %p278, %s19, 1
      %s280 = smul.addr %s279, 3
      %s281 = smul.addr %s280, 8
      %s282 = scalar_lea.vmem %s0, %s281
      %p283 = pneg %p40
      %p284 = pneg %p37
      %p285 = scmp.lt.s32.totalorder %s19, 1
      %s286 = scalar_select %p285, %s19, 1
      %s287 = smul.addr %s286, 3
      %s288 = smul.addr %s287, 8
      %s289 = scalar_lea.vmem %s1, %s288
      %p290 = pneg %p66
      %p291 = pneg %p63
      %p292 = pneg %p87
      %p293 = pneg %p84
      %p294 = pneg %p108
      %p295 = pneg %p105
      %p296 = pneg %p129
      %p297 = pneg %p126
      %p298 = pneg %p150
      %p299 = pneg %p147
      %p300 = pneg %p171
      %p301 = pneg %p168
      %p302 = pneg %p192
      %p303 = pneg %p189
      %p304 = pneg %p218
      %p305 = pneg %p215
      %p306 = scmp.lt.s32.totalorder %s19, 1
      %s307 = scalar_select %p306, %s19, 1
      %s308 = smul.addr %s307, 3
      %s309 = smul.addr %s308, 8
      %s310 = scalar_lea.vmem %s8, %s309
      %p311 = scmp.lt.s32.totalorder %s19, 1
      %s312 = scalar_select %p311, %s19, 1
      %s313 = smul.addr %s312, 3
      %s314 = smul.addr %s313, 8
      %s315 = scalar_lea.vmem %s0, %s314
      %p316 = scmp.lt.s32.totalorder %s19, 1
      %s317 = scalar_select %p316, %s19, 1
      %s318 = smul.addr %s317, 3
      %s319 = smul.addr %s318, 8
      %s320 = scalar_lea.vmem %s1, %s319
      %p321 = scmp.lt.s32.totalorder %s19, 1
      %s322 = scalar_select %p321, %s19, 1
      %s323 = smul.addr %s322, 3
      %s324 = smul.addr %s323, 8
      %s325 = scalar_lea.vmem %s8, %s324
      %v326 = vld [vmem:[%s315] sm:$0xff]
      %v327 = vld [vmem:[%s315 + $0x8] sm:$0xff]
      %v328 = vld [vmem:[%s315 + $0x10] sm:$0xff]
      %v329 = vld [vmem:[%s320] sm:$0xff]
      %v330 = vld [vmem:[%s320 + $0x8] sm:$0xff]
      %v331 = vld [vmem:[%s320 + $0x10] sm:$0xff]
      %v332 = vlaneseq
      %v333 = vshrl.u32 %v332, 7
      %v334 = vadd.s32 %v333, 8
      %v335 = vadd.s32 %v333, 16
      %vm336 = vcmp.eq.s32.totalorder %v333, 0
      %vm337 = vcmp.eq.s32.totalorder %v334, 0
      %vm338 = vcmp.eq.s32.totalorder %v335, 0
      %vm339 = vcmp.eq.s32.totalorder %v333, 16
      %vm340 = vcmp.eq.s32.totalorder %v334, 16
      %vm341 = vcmp.eq.s32.totalorder %v335, 16
      %vm342 = vmor %vm336, %vm339
      %vm343 = vmor %vm337, %vm340
      %vm344 = vmor %vm338, %vm341
      %vm345 = vcmp.eq.s32.totalorder %v333, 15
      %vm346 = vcmp.eq.s32.totalorder %v334, 15
      %vm347 = vcmp.eq.s32.totalorder %v335, 15
      %vm348 = vcmp.eq.s32.totalorder %v333, 23
      %vm349 = vcmp.eq.s32.totalorder %v334, 23
      %vm350 = vcmp.eq.s32.totalorder %v335, 23
      %vm351 = vmor %vm345, %vm348
      %vm352 = vmor %vm346, %vm349
      %vm353 = vmor %vm347, %vm350
      %v354 = vsel %vm342, 0.0, 1.0
      %v355 = vsel %vm343, 0.0, 1.0
      %v356 = vsel %vm344, 0.0, 1.0
      %v357 = vsel %vm351, 0.0, 1.0
      %v358 = vsel %vm352, 0.0, 1.0
      %v359 = vsel %vm353, 0.0, 1.0
      %361 = vset.pattern.permute.xlu0 0
      %362 = vperm.xlu0 %361, %v329
      %v363 = vpop.permute.xlu0 %362
      %366 = vset.pattern.permute.xlu0 0
      %367 = vperm.xlu0 %366, %v330
      %v368 = vpop.permute.xlu0 %367
      %371 = vset.pattern.permute.xlu0 0
      %372 = vperm.xlu0 %371, %v331
      %v373 = vpop.permute.xlu0 %372
      %v375 = vrot.slane %v326, 7
      %v376 = vrot.slane %v327, 7
      %v377 = vrot.slane %v328, 7
      %vm378 = vcmp.lt.s32.totalorder %v333, 1
      %v379 = vsel %vm378, %v376, %v377
      %v380 = vsel %vm378, %v375, %v376
      %v381 = vsel %vm378, %v377, %v375
      %v382 = vmul.f32 %v381, %v354
      %v383 = vmul.f32 %v380, %v355
      %v384 = vmul.f32 %v379, %v356
      %v385 = vrot.slane %v326, 1
      %v386 = vrot.slane %v327, 1
      %v387 = vrot.slane %v328, 1
      %vm388 = vcmp.lt.s32.totalorder %v333, 7
      %v389 = vsel %vm388, %v386, %v387
      %v390 = vsel %vm388, %v385, %v386
      %v391 = vsel %vm388, %v387, %v385
      %v392 = vmul.f32 %v390, %v357
      %v393 = vmul.f32 %v389, %v358
      %v394 = vmul.f32 %v391, %v359
      %398 = vrot.lane.b32.xlu0 %v326, 32
      %v399 = vpop.permute.xlu0 %398
      %400 = vrot.lane.b32.xlu0 %v327, 32
      %v401 = vpop.permute.xlu0 %400
      %402 = vrot.lane.b32.xlu0 %v328, 32
      %v403 = vpop.permute.xlu0 %402
      %410 = vrot.lane.b32.xlu0 %v392, 64
      %v411 = vpop.permute.xlu0 %410
      %412 = vrot.lane.b32.xlu0 %v393, 64
      %v413 = vpop.permute.xlu0 %412
      %414 = vrot.lane.b32.xlu0 %v394, 64
      %v415 = vpop.permute.xlu0 %414
      %vm419 = vcmask 261120
      %v420 = vsel %vm419, %v382, %v399
      %v421 = vsel %vm419, %v383, %v401
      %v422 = vsel %vm419, %v384, %v403
      %vm423 = vcmask 523264
      %v424 = vsel %vm423, %v420, %v411
      %v425 = vsel %vm423, %v421, %v413
      %v426 = vsel %vm423, %v422, %v415
      %v427 = vld [vmem:[%s2] sm:$0xff]
      %v428 = vld [vmem:[%s2 + $0x8] sm:$0xff]
      %v429 = vld [vmem:[%s2 + $0x10] sm:$0xff]
      %v430 = vld [vmem:[%s2 + $0x18] sm:$0xff]
      %v431 = vld [vmem:[%s2 + $0x20] sm:$0xff]
      %v432 = vld [vmem:[%s2 + $0x28] sm:$0xff]
      %v433 = vld [vmem:[%s2 + $0x30] sm:$0xff]
      %v434 = vld [vmem:[%s2 + $0x38] sm:$0xff]
      %v435 = vld [vmem:[%s2 + $0x40] sm:$0xff]
      %v436 = vld [vmem:[%s2 + $0x48] sm:$0xff]
      %v437 = vld [vmem:[%s2 + $0x50] sm:$0xff]
      %v438 = vld [vmem:[%s2 + $0x58] sm:$0xff]
      %v439 = vld [vmem:[%s3] sm:$0x1]
      %v441 = vlaneseq
      %v442 = vshrl.u32 %v441, 7
      %v443 = vsub.s32 0, %v442
      %v444 = vrot.slane %v439, %v443
      %vm446 = vcmask 785408
      %v448 = vsel %vm446, %v424, 0
      %v451 = vsel %vm446, %v425, 0
      %v454 = vsel %vm446, %v426, 0
      %456 = vmatprep.subr.mxu0 0.0
      %457 = vmatpush1.msra.mxu0 0.0
      %458 = vmatprep.subr.mxu0 0.0
      %459 = vmatpush1.msra.mxu0 0.0
      %460 = vmatprep.subr.mxu0 0.0
      %461 = vmatpush1.msra.mxu0 0.0
      %462 = vmatprep.subr.mxu0 0.0
      %463 = vmatpush1.msra.mxu0 0.0
      %464 = vmatprep.subr.mxu0 0.0
      %v465 = vand.u32 %v438, 4294901760
      %466 = vmatpush1.msra.mxu0 %v465
      %467 = vmatprep.subr.mxu0 0.0
      %v468 = vand.u32 %v437, 4294901760
      %469 = vmatpush1.msra.mxu0 %v468
      %470 = vmatprep.subr.mxu0 0.0
      %v471 = vand.u32 %v436, 4294901760
      %472 = vmatpush1.msra.mxu0 %v471
      %473 = vmatprep.subr.mxu0 0.0
      %v474 = vand.u32 %v435, 4294901760
      %475 = vmatpush1.msra.mxu0 %v474
      %476 = vmatprep.subr.mxu0 0.0
      %v477 = vand.u32 %v434, 4294901760
      %478 = vmatpush1.msra.mxu0 %v477
      %479 = vmatprep.subr.mxu0 0.0
      %v480 = vand.u32 %v433, 4294901760
      %481 = vmatpush1.msra.mxu0 %v480
      %482 = vmatprep.subr.mxu0 0.0
      %v483 = vand.u32 %v432, 4294901760
      %484 = vmatpush1.msra.mxu0 %v483
      %485 = vmatprep.subr.mxu0 0.0
      %v486 = vand.u32 %v431, 4294901760
      %487 = vmatpush1.msra.mxu0 %v486
      %488 = vmatprep.subr.mxu0 0.0
      %v489 = vand.u32 %v430, 4294901760
      %490 = vmatpush1.msra.mxu0 %v489
      %491 = vmatprep.subr.mxu0 0.0
      %v492 = vand.u32 %v429, 4294901760
      %493 = vmatpush1.msra.mxu0 %v492
      %494 = vmatprep.subr.mxu0 0.0
      %v495 = vand.u32 %v428, 4294901760
      %496 = vmatpush1.msra.mxu0 %v495
      %497 = vmatprep.subr.mxu0 0.0
      %v498 = vand.u32 %v427, 4294901760
      %499 = vmatpush1.msra.mxu0 %v498
      %500 = vmatprep.subr.mxu0 0.0
      %501 = vmatpush2.msra.mxu0 0.0
      %502 = vmatprep.subr.mxu0 0.0
      %503 = vmatpush2.msra.mxu0 0.0
      %504 = vmatprep.subr.mxu0 0.0
      %505 = vmatpush2.msra.mxu0 0.0
      %506 = vmatprep.subr.mxu0 0.0
      %507 = vmatpush2.msra.mxu0 0.0
      %508 = vmatprep.subr.mxu0 0.0
      %509 = vmatpush2.msra.mxu0 0.0
      %510 = vmatprep.subr.mxu0 0.0
      %511 = vmatpush2.msra.mxu0 0.0
      %512 = vmatprep.subr.mxu0 0.0
      %513 = vmatpush2.msra.mxu0 0.0
      %514 = vmatprep.subr.mxu0 0.0
      %515 = vmatpush2.msra.mxu0 0.0
      %516 = vmatprep.subr.mxu0 0.0
      %517 = vmatpush2.msra.mxu0 0.0
      %518 = vmatprep.subr.mxu0 0.0
      %519 = vmatpush2.msra.mxu0 0.0
      %520 = vmatprep.subr.mxu0 0.0
      %521 = vmatpush2.msra.mxu0 0.0
      %522 = vmatprep.subr.mxu0 0.0
      %523 = vmatpush2.msra.mxu0 0.0
      %524 = vmatprep.subr.mxu0 0.0
      %525 = vmatpush2.msra.mxu0 0.0
      %526 = vmatprep.subr.mxu0 0.0
      %527 = vmatpush2.msra.mxu0 0.0
      %528 = vmatprep.subr.mxu0 0.0
      %529 = vmatpush2.msra.mxu0 0.0
      %530 = vmatprep.subr.mxu0 0.0
      %531 = vmatpush2.msra.mxu0 0.0
      %532 = vmatprep.mubr.f32.mxu0 0.0
      %v533 = vand.u32 %v448, 4294901760
      %v534 = vsub.f32 %v448, %v533
      %v535 = vand.u32 %v534, 4294901760
      %v536 = vsub.f32 %v534, %v535
      %v537 = vand.u32 %v536, 4294901760
      %538 = vmatmul.mubr.f32.gmra.mxu0 %v537
      %v539 = vpop.f32.mrf.mxu0
      %v540 = vadd.f32 %v444, %v539
      %v541 = vpop.f32.mrf.mxu0
      %542 = vmatprep.mubr.f32.mxu0 0.0
      %v543 = vand.u32 %v451, 4294901760
      %v544 = vsub.f32 %v451, %v543
      %v545 = vand.u32 %v544, 4294901760
      %v546 = vsub.f32 %v544, %v545
      %v547 = vand.u32 %v546, 4294901760
      %548 = vmatmul.mubr.f32.gmra.mxu0 %v547
      %v549 = vpop.f32.mrf.mxu0
      %v550 = vadd.f32 %v444, %v549
      %v551 = vpop.f32.mrf.mxu0
      %552 = vmatprep.mubr.f32.mxu0 0.0
      %v553 = vand.u32 %v454, 4294901760
      %v554 = vsub.f32 %v454, %v553
      %v555 = vand.u32 %v554, 4294901760
      %v556 = vsub.f32 %v554, %v555
      %v557 = vand.u32 %v556, 4294901760
      %558 = vmatmul.mubr.f32.gmra.mxu0 %v557
      %v559 = vpop.f32.mrf.mxu0
      %v560 = vadd.f32 %v444, %v559
      %v561 = vpop.f32.mrf.mxu0
      %562 = vdwg.mxu0
      %563 = vmatprep.subr.mxu0 0.0
      %564 = vmatpush1.msra.mxu0 0.0
      %565 = vmatprep.subr.mxu0 0.0
      %566 = vmatpush1.msra.mxu0 0.0
      %567 = vmatprep.subr.mxu0 0.0
      %568 = vmatpush1.msra.mxu0 0.0
      %569 = vmatprep.subr.mxu0 0.0
      %570 = vmatpush1.msra.mxu0 0.0
      %571 = vmatprep.subr.mxu0 0.0
      %v572 = vand.u32 %v438, 4294901760
      %v573 = vsub.f32 %v438, %v572
      %v574 = vand.u32 %v573, 4294901760
      %v575 = vsub.f32 %v573, %v574
      %v576 = vand.u32 %v575, 4294901760
      %577 = vmatpush1.msra.mxu0 %v576
      %578 = vmatprep.subr.mxu0 0.0
      %v579 = vand.u32 %v437, 4294901760
      %v580 = vsub.f32 %v437, %v579
      %v581 = vand.u32 %v580, 4294901760
      %v582 = vsub.f32 %v580, %v581
      %v583 = vand.u32 %v582, 4294901760
      %584 = vmatpush1.msra.mxu0 %v583
      %585 = vmatprep.subr.mxu0 0.0
      %v586 = vand.u32 %v436, 4294901760
      %v587 = vsub.f32 %v436, %v586
      %v588 = vand.u32 %v587, 4294901760
      %v589 = vsub.f32 %v587, %v588
      %v590 = vand.u32 %v589, 4294901760
      %591 = vmatpush1.msra.mxu0 %v590
      %592 = vmatprep.subr.mxu0 0.0
      %v593 = vand.u32 %v435, 4294901760
      %v594 = vsub.f32 %v435, %v593
      %v595 = vand.u32 %v594, 4294901760
      %v596 = vsub.f32 %v594, %v595
      %v597 = vand.u32 %v596, 4294901760
      %598 = vmatpush1.msra.mxu0 %v597
      %599 = vmatprep.subr.mxu0 0.0
      %v600 = vand.u32 %v434, 4294901760
      %v601 = vsub.f32 %v434, %v600
      %v602 = vand.u32 %v601, 4294901760
      %v603 = vsub.f32 %v601, %v602
      %v604 = vand.u32 %v603, 4294901760
      %605 = vmatpush1.msra.mxu0 %v604
      %606 = vmatprep.subr.mxu0 0.0
      %v607 = vand.u32 %v433, 4294901760
      %v608 = vsub.f32 %v433, %v607
      %v609 = vand.u32 %v608, 4294901760
      %v610 = vsub.f32 %v608, %v609
      %v611 = vand.u32 %v610, 4294901760
      %612 = vmatpush1.msra.mxu0 %v611
      %613 = vmatprep.subr.mxu0 0.0
      %v614 = vand.u32 %v432, 4294901760
      %v615 = vsub.f32 %v432, %v614
      %v616 = vand.u32 %v615, 4294901760
      %v617 = vsub.f32 %v615, %v616
      %v618 = vand.u32 %v617, 4294901760
      %619 = vmatpush1.msra.mxu0 %v618
      %620 = vmatprep.subr.mxu0 0.0
      %v621 = vand.u32 %v431, 4294901760
      %v622 = vsub.f32 %v431, %v621
      %v623 = vand.u32 %v622, 4294901760
      %v624 = vsub.f32 %v622, %v623
      %v625 = vand.u32 %v624, 4294901760
      %626 = vmatpush1.msra.mxu0 %v625
      %627 = vmatprep.subr.mxu0 0.0
      %v628 = vand.u32 %v430, 4294901760
      %v629 = vsub.f32 %v430, %v628
      %v630 = vand.u32 %v629, 4294901760
      %v631 = vsub.f32 %v629, %v630
      %v632 = vand.u32 %v631, 4294901760
      %633 = vmatpush1.msra.mxu0 %v632
      %634 = vmatprep.subr.mxu0 0.0
      %v635 = vand.u32 %v429, 4294901760
      %v636 = vsub.f32 %v429, %v635
      %v637 = vand.u32 %v636, 4294901760
      %v638 = vsub.f32 %v636, %v637
      %v639 = vand.u32 %v638, 4294901760
      %640 = vmatpush1.msra.mxu0 %v639
      %641 = vmatprep.subr.mxu0 0.0
      %v642 = vand.u32 %v428, 4294901760
      %v643 = vsub.f32 %v428, %v642
      %v644 = vand.u32 %v643, 4294901760
      %v645 = vsub.f32 %v643, %v644
      %v646 = vand.u32 %v645, 4294901760
      %647 = vmatpush1.msra.mxu0 %v646
      %648 = vmatprep.subr.mxu0 0.0
      %v649 = vand.u32 %v427, 4294901760
      %v650 = vsub.f32 %v427, %v649
      %v651 = vand.u32 %v650, 4294901760
      %v652 = vsub.f32 %v650, %v651
      %v653 = vand.u32 %v652, 4294901760
      %654 = vmatpush1.msra.mxu0 %v653
      %655 = vmatprep.subr.mxu0 0.0
      %656 = vmatpush2.msra.mxu0 0.0
      %657 = vmatprep.subr.mxu0 0.0
      %658 = vmatpush2.msra.mxu0 0.0
      %659 = vmatprep.subr.mxu0 0.0
      %660 = vmatpush2.msra.mxu0 0.0
      %661 = vmatprep.subr.mxu0 0.0
      %662 = vmatpush2.msra.mxu0 0.0
      %663 = vmatprep.subr.mxu0 0.0
      %664 = vmatpush2.msra.mxu0 0.0
      %665 = vmatprep.subr.mxu0 0.0
      %666 = vmatpush2.msra.mxu0 0.0
      %667 = vmatprep.subr.mxu0 0.0
      %668 = vmatpush2.msra.mxu0 0.0
      %669 = vmatprep.subr.mxu0 0.0
      %670 = vmatpush2.msra.mxu0 0.0
      %671 = vmatprep.subr.mxu0 0.0
      %672 = vmatpush2.msra.mxu0 0.0
      %673 = vmatprep.subr.mxu0 0.0
      %674 = vmatpush2.msra.mxu0 0.0
      %675 = vmatprep.subr.mxu0 0.0
      %676 = vmatpush2.msra.mxu0 0.0
      %677 = vmatprep.subr.mxu0 0.0
      %678 = vmatpush2.msra.mxu0 0.0
      %679 = vmatprep.subr.mxu0 0.0
      %680 = vmatpush2.msra.mxu0 0.0
      %681 = vmatprep.subr.mxu0 0.0
      %682 = vmatpush2.msra.mxu0 0.0
      %683 = vmatprep.subr.mxu0 0.0
      %684 = vmatpush2.msra.mxu0 0.0
      %685 = vmatprep.subr.mxu0 0.0
      %686 = vmatpush2.msra.mxu0 0.0
      %687 = vmatprep.mubr.f32.mxu0 0.0
      %v688 = vand.u32 %v448, 4294901760
      %689 = vmatmul.mubr.f32.gmra.mxu0 %v688
      %v690 = vpop.f32.mrf.mxu0
      %v691 = vadd.f32 %v540, %v690
      %v692 = vpop.f32.mrf.mxu0
      %693 = vmatprep.mubr.f32.mxu0 0.0
      %v694 = vand.u32 %v451, 4294901760
      %695 = vmatmul.mubr.f32.gmra.mxu0 %v694
      %v696 = vpop.f32.mrf.mxu0
      %v697 = vadd.f32 %v550, %v696
      %v698 = vpop.f32.mrf.mxu0
      %699 = vmatprep.mubr.f32.mxu0 0.0
      %v700 = vand.u32 %v454, 4294901760
      %701 = vmatmul.mubr.f32.gmra.mxu0 %v700
      %v702 = vpop.f32.mrf.mxu0
      %v703 = vadd.f32 %v560, %v702
      %v704 = vpop.f32.mrf.mxu0
      %705 = vdwg.mxu0
      %706 = vmatprep.subr.mxu0 0.0
      %707 = vmatpush1.msra.mxu0 0.0
      %708 = vmatprep.subr.mxu0 0.0
      %709 = vmatpush1.msra.mxu0 0.0
      %710 = vmatprep.subr.mxu0 0.0
      %711 = vmatpush1.msra.mxu0 0.0
      %712 = vmatprep.subr.mxu0 0.0
      %713 = vmatpush1.msra.mxu0 0.0
      %714 = vmatprep.subr.mxu0 0.0
      %v715 = vand.u32 %v438, 4294901760
      %v716 = vsub.f32 %v438, %v715
      %717 = vmatpush1.msra.mxu0 %v716
      %718 = vmatprep.subr.mxu0 0.0
      %v719 = vand.u32 %v437, 4294901760
      %v720 = vsub.f32 %v437, %v719
      %721 = vmatpush1.msra.mxu0 %v720
      %722 = vmatprep.subr.mxu0 0.0
      %v723 = vand.u32 %v436, 4294901760
      %v724 = vsub.f32 %v436, %v723
      %725 = vmatpush1.msra.mxu0 %v724
      %726 = vmatprep.subr.mxu0 0.0
      %v727 = vand.u32 %v435, 4294901760
      %v728 = vsub.f32 %v435, %v727
      %729 = vmatpush1.msra.mxu0 %v728
      %730 = vmatprep.subr.mxu0 0.0
      %v731 = vand.u32 %v434, 4294901760
      %v732 = vsub.f32 %v434, %v731
      %733 = vmatpush1.msra.mxu0 %v732
      %734 = vmatprep.subr.mxu0 0.0
      %v735 = vand.u32 %v433, 4294901760
      %v736 = vsub.f32 %v433, %v735
      %737 = vmatpush1.msra.mxu0 %v736
      %738 = vmatprep.subr.mxu0 0.0
      %v739 = vand.u32 %v432, 4294901760
      %v740 = vsub.f32 %v432, %v739
      %741 = vmatpush1.msra.mxu0 %v740
      %742 = vmatprep.subr.mxu0 0.0
      %v743 = vand.u32 %v431, 4294901760
      %v744 = vsub.f32 %v431, %v743
      %745 = vmatpush1.msra.mxu0 %v744
      %746 = vmatprep.subr.mxu0 0.0
      %v747 = vand.u32 %v430, 4294901760
      %v748 = vsub.f32 %v430, %v747
      %749 = vmatpush1.msra.mxu0 %v748
      %750 = vmatprep.subr.mxu0 0.0
      %v751 = vand.u32 %v429, 4294901760
      %v752 = vsub.f32 %v429, %v751
      %753 = vmatpush1.msra.mxu0 %v752
      %754 = vmatprep.subr.mxu0 0.0
      %v755 = vand.u32 %v428, 4294901760
      %v756 = vsub.f32 %v428, %v755
      %757 = vmatpush1.msra.mxu0 %v756
      %758 = vmatprep.subr.mxu0 0.0
      %v759 = vand.u32 %v427, 4294901760
      %v760 = vsub.f32 %v427, %v759
      %761 = vmatpush1.msra.mxu0 %v760
      %762 = vmatprep.subr.mxu0 0.0
      %763 = vmatpush2.msra.mxu0 0.0
      %764 = vmatprep.subr.mxu0 0.0
      %765 = vmatpush2.msra.mxu0 0.0
      %766 = vmatprep.subr.mxu0 0.0
      %767 = vmatpush2.msra.mxu0 0.0
      %768 = vmatprep.subr.mxu0 0.0
      %769 = vmatpush2.msra.mxu0 0.0
      %770 = vmatprep.subr.mxu0 0.0
      %771 = vmatpush2.msra.mxu0 0.0
      %772 = vmatprep.subr.mxu0 0.0
      %773 = vmatpush2.msra.mxu0 0.0
      %774 = vmatprep.subr.mxu0 0.0
      %775 = vmatpush2.msra.mxu0 0.0
      %776 = vmatprep.subr.mxu0 0.0
      %777 = vmatpush2.msra.mxu0 0.0
      %778 = vmatprep.subr.mxu0 0.0
      %779 = vmatpush2.msra.mxu0 0.0
      %780 = vmatprep.subr.mxu0 0.0
      %781 = vmatpush2.msra.mxu0 0.0
      %782 = vmatprep.subr.mxu0 0.0
      %783 = vmatpush2.msra.mxu0 0.0
      %784 = vmatprep.subr.mxu0 0.0
      %785 = vmatpush2.msra.mxu0 0.0
      %786 = vmatprep.subr.mxu0 0.0
      %787 = vmatpush2.msra.mxu0 0.0
      %788 = vmatprep.subr.mxu0 0.0
      %789 = vmatpush2.msra.mxu0 0.0
      %790 = vmatprep.subr.mxu0 0.0
      %791 = vmatpush2.msra.mxu0 0.0
      %792 = vmatprep.subr.mxu0 0.0
      %793 = vmatpush2.msra.mxu0 0.0
      %794 = vmatprep.mubr.f32.mxu0 0.0
      %v795 = vand.u32 %v448, 4294901760
      %v796 = vsub.f32 %v448, %v795
      %797 = vmatmul.mubr.f32.gmra.mxu0 %v796
      %v798 = vpop.f32.mrf.mxu0
      %v799 = vadd.f32 %v691, %v798
      %v800 = vpop.f32.mrf.mxu0
      %801 = vmatprep.mubr.f32.mxu0 0.0
      %v802 = vand.u32 %v451, 4294901760
      %v803 = vsub.f32 %v451, %v802
      %804 = vmatmul.mubr.f32.gmra.mxu0 %v803
      %v805 = vpop.f32.mrf.mxu0
      %v806 = vadd.f32 %v697, %v805
      %v807 = vpop.f32.mrf.mxu0
      %808 = vmatprep.mubr.f32.mxu0 0.0
      %v809 = vand.u32 %v454, 4294901760
      %v810 = vsub.f32 %v454, %v809
      %811 = vmatmul.mubr.f32.gmra.mxu0 %v810
      %v812 = vpop.f32.mrf.mxu0
      %v813 = vadd.f32 %v703, %v812
      %v814 = vpop.f32.mrf.mxu0
      %815 = vdwg.mxu0
      %816 = vmatprep.subr.mxu0 0.0
      %817 = vmatpush1.msra.mxu0 0.0
      %818 = vmatprep.subr.mxu0 0.0
      %819 = vmatpush1.msra.mxu0 0.0
      %820 = vmatprep.subr.mxu0 0.0
      %821 = vmatpush1.msra.mxu0 0.0
      %822 = vmatprep.subr.mxu0 0.0
      %823 = vmatpush1.msra.mxu0 0.0
      %824 = vmatprep.subr.mxu0 0.0
      %v825 = vand.u32 %v438, 4294901760
      %826 = vmatpush1.msra.mxu0 %v825
      %827 = vmatprep.subr.mxu0 0.0
      %v828 = vand.u32 %v437, 4294901760
      %829 = vmatpush1.msra.mxu0 %v828
      %830 = vmatprep.subr.mxu0 0.0
      %v831 = vand.u32 %v436, 4294901760
      %832 = vmatpush1.msra.mxu0 %v831
      %833 = vmatprep.subr.mxu0 0.0
      %v834 = vand.u32 %v435, 4294901760
      %835 = vmatpush1.msra.mxu0 %v834
      %836 = vmatprep.subr.mxu0 0.0
      %v837 = vand.u32 %v434, 4294901760
      %838 = vmatpush1.msra.mxu0 %v837
      %839 = vmatprep.subr.mxu0 0.0
      %v840 = vand.u32 %v433, 4294901760
      %841 = vmatpush1.msra.mxu0 %v840
      %842 = vmatprep.subr.mxu0 0.0
      %v843 = vand.u32 %v432, 4294901760
      %844 = vmatpush1.msra.mxu0 %v843
      %845 = vmatprep.subr.mxu0 0.0
      %v846 = vand.u32 %v431, 4294901760
      %847 = vmatpush1.msra.mxu0 %v846
      %848 = vmatprep.subr.mxu0 0.0
      %v849 = vand.u32 %v430, 4294901760
      %850 = vmatpush1.msra.mxu0 %v849
      %851 = vmatprep.subr.mxu0 0.0
      %v852 = vand.u32 %v429, 4294901760
      %853 = vmatpush1.msra.mxu0 %v852
      %854 = vmatprep.subr.mxu0 0.0
      %v855 = vand.u32 %v428, 4294901760
      %856 = vmatpush1.msra.mxu0 %v855
      %857 = vmatprep.subr.mxu0 0.0
      %v858 = vand.u32 %v427, 4294901760
      %859 = vmatpush1.msra.mxu0 %v858
      %860 = vmatprep.subr.mxu0 0.0
      %861 = vmatpush2.msra.mxu0 0.0
      %862 = vmatprep.subr.mxu0 0.0
      %863 = vmatpush2.msra.mxu0 0.0
      %864 = vmatprep.subr.mxu0 0.0
      %865 = vmatpush2.msra.mxu0 0.0
      %866 = vmatprep.subr.mxu0 0.0
      %867 = vmatpush2.msra.mxu0 0.0
      %868 = vmatprep.subr.mxu0 0.0
      %869 = vmatpush2.msra.mxu0 0.0
      %870 = vmatprep.subr.mxu0 0.0
      %871 = vmatpush2.msra.mxu0 0.0
      %872 = vmatprep.subr.mxu0 0.0
      %873 = vmatpush2.msra.mxu0 0.0
      %874 = vmatprep.subr.mxu0 0.0
      %875 = vmatpush2.msra.mxu0 0.0
      %876 = vmatprep.subr.mxu0 0.0
      %877 = vmatpush2.msra.mxu0 0.0
      %878 = vmatprep.subr.mxu0 0.0
      %879 = vmatpush2.msra.mxu0 0.0
      %880 = vmatprep.subr.mxu0 0.0
      %881 = vmatpush2.msra.mxu0 0.0
      %882 = vmatprep.subr.mxu0 0.0
      %883 = vmatpush2.msra.mxu0 0.0
      %884 = vmatprep.subr.mxu0 0.0
      %885 = vmatpush2.msra.mxu0 0.0
      %886 = vmatprep.subr.mxu0 0.0
      %887 = vmatpush2.msra.mxu0 0.0
      %888 = vmatprep.subr.mxu0 0.0
      %889 = vmatpush2.msra.mxu0 0.0
      %890 = vmatprep.subr.mxu0 0.0
      %891 = vmatpush2.msra.mxu0 0.0
      %892 = vmatprep.mubr.f32.mxu0 0.0
      %v893 = vand.u32 %v448, 4294901760
      %v894 = vsub.f32 %v448, %v893
      %v895 = vand.u32 %v894, 4294901760
      %896 = vmatmul.mubr.f32.gmra.mxu0 %v895
      %v897 = vpop.f32.mrf.mxu0
      %v898 = vadd.f32 %v799, %v897
      %v899 = vpop.f32.mrf.mxu0
      %900 = vmatprep.mubr.f32.mxu0 0.0
      %v901 = vand.u32 %v451, 4294901760
      %v902 = vsub.f32 %v451, %v901
      %v903 = vand.u32 %v902, 4294901760
      %904 = vmatmul.mubr.f32.gmra.mxu0 %v903
      %v905 = vpop.f32.mrf.mxu0
      %v906 = vadd.f32 %v806, %v905
      %v907 = vpop.f32.mrf.mxu0
      %908 = vmatprep.mubr.f32.mxu0 0.0
      %v909 = vand.u32 %v454, 4294901760
      %v910 = vsub.f32 %v454, %v909
      %v911 = vand.u32 %v910, 4294901760
      %912 = vmatmul.mubr.f32.gmra.mxu0 %v911
      %v913 = vpop.f32.mrf.mxu0
      %v914 = vadd.f32 %v813, %v913
      %v915 = vpop.f32.mrf.mxu0
      %916 = vdwg.mxu0
      %917 = vmatprep.subr.mxu0 0.0
      %918 = vmatpush1.msra.mxu0 0.0
      %919 = vmatprep.subr.mxu0 0.0
      %920 = vmatpush1.msra.mxu0 0.0
      %921 = vmatprep.subr.mxu0 0.0
      %922 = vmatpush1.msra.mxu0 0.0
      %923 = vmatprep.subr.mxu0 0.0
      %924 = vmatpush1.msra.mxu0 0.0
      %925 = vmatprep.subr.mxu0 0.0
      %v926 = vand.u32 %v438, 4294901760
      %v927 = vsub.f32 %v438, %v926
      %v928 = vand.u32 %v927, 4294901760
      %929 = vmatpush1.msra.mxu0 %v928
      %930 = vmatprep.subr.mxu0 0.0
      %v931 = vand.u32 %v437, 4294901760
      %v932 = vsub.f32 %v437, %v931
      %v933 = vand.u32 %v932, 4294901760
      %934 = vmatpush1.msra.mxu0 %v933
      %935 = vmatprep.subr.mxu0 0.0
      %v936 = vand.u32 %v436, 4294901760
      %v937 = vsub.f32 %v436, %v936
      %v938 = vand.u32 %v937, 4294901760
      %939 = vmatpush1.msra.mxu0 %v938
      %940 = vmatprep.subr.mxu0 0.0
      %v941 = vand.u32 %v435, 4294901760
      %v942 = vsub.f32 %v435, %v941
      %v943 = vand.u32 %v942, 4294901760
      %944 = vmatpush1.msra.mxu0 %v943
      %945 = vmatprep.subr.mxu0 0.0
      %v946 = vand.u32 %v434, 4294901760
      %v947 = vsub.f32 %v434, %v946
      %v948 = vand.u32 %v947, 4294901760
      %949 = vmatpush1.msra.mxu0 %v948
      %950 = vmatprep.subr.mxu0 0.0
      %v951 = vand.u32 %v433, 4294901760
      %v952 = vsub.f32 %v433, %v951
      %v953 = vand.u32 %v952, 4294901760
      %954 = vmatpush1.msra.mxu0 %v953
      %955 = vmatprep.subr.mxu0 0.0
      %v956 = vand.u32 %v432, 4294901760
      %v957 = vsub.f32 %v432, %v956
      %v958 = vand.u32 %v957, 4294901760
      %959 = vmatpush1.msra.mxu0 %v958
      %960 = vmatprep.subr.mxu0 0.0
      %v961 = vand.u32 %v431, 4294901760
      %v962 = vsub.f32 %v431, %v961
      %v963 = vand.u32 %v962, 4294901760
      %964 = vmatpush1.msra.mxu0 %v963
      %965 = vmatprep.subr.mxu0 0.0
      %v966 = vand.u32 %v430, 4294901760
      %v967 = vsub.f32 %v430, %v966
      %v968 = vand.u32 %v967, 4294901760
      %969 = vmatpush1.msra.mxu0 %v968
      %970 = vmatprep.subr.mxu0 0.0
      %v971 = vand.u32 %v429, 4294901760
      %v972 = vsub.f32 %v429, %v971
      %v973 = vand.u32 %v972, 4294901760
      %974 = vmatpush1.msra.mxu0 %v973
      %975 = vmatprep.subr.mxu0 0.0
      %v976 = vand.u32 %v428, 4294901760
      %v977 = vsub.f32 %v428, %v976
      %v978 = vand.u32 %v977, 4294901760
      %979 = vmatpush1.msra.mxu0 %v978
      %980 = vmatprep.subr.mxu0 0.0
      %v981 = vand.u32 %v427, 4294901760
      %v982 = vsub.f32 %v427, %v981
      %v983 = vand.u32 %v982, 4294901760
      %984 = vmatpush1.msra.mxu0 %v983
      %985 = vmatprep.subr.mxu0 0.0
      %986 = vmatpush2.msra.mxu0 0.0
      %987 = vmatprep.subr.mxu0 0.0
      %988 = vmatpush2.msra.mxu0 0.0
      %989 = vmatprep.subr.mxu0 0.0
      %990 = vmatpush2.msra.mxu0 0.0
      %991 = vmatprep.subr.mxu0 0.0
      %992 = vmatpush2.msra.mxu0 0.0
      %993 = vmatprep.subr.mxu0 0.0
      %994 = vmatpush2.msra.mxu0 0.0
      %995 = vmatprep.subr.mxu0 0.0
      %996 = vmatpush2.msra.mxu0 0.0
      %997 = vmatprep.subr.mxu0 0.0
      %998 = vmatpush2.msra.mxu0 0.0
      %999 = vmatprep.subr.mxu0 0.0
      %1000 = vmatpush2.msra.mxu0 0.0
      %1001 = vmatprep.subr.mxu0 0.0
      %1002 = vmatpush2.msra.mxu0 0.0
      %1003 = vmatprep.subr.mxu0 0.0
      %1004 = vmatpush2.msra.mxu0 0.0
      %1005 = vmatprep.subr.mxu0 0.0
      %1006 = vmatpush2.msra.mxu0 0.0
      %1007 = vmatprep.subr.mxu0 0.0
      %1008 = vmatpush2.msra.mxu0 0.0
      %1009 = vmatprep.subr.mxu0 0.0
      %1010 = vmatpush2.msra.mxu0 0.0
      %1011 = vmatprep.subr.mxu0 0.0
      %1012 = vmatpush2.msra.mxu0 0.0
      %1013 = vmatprep.subr.mxu0 0.0
      %1014 = vmatpush2.msra.mxu0 0.0
      %1015 = vmatprep.subr.mxu0 0.0
      %1016 = vmatpush2.msra.mxu0 0.0
      %1017 = vmatprep.mubr.f32.mxu0 0.0
      %v1018 = vand.u32 %v448, 4294901760
      %1019 = vmatmul.mubr.f32.gmra.mxu0 %v1018
      %v1020 = vpop.f32.mrf.mxu0
      %v1021 = vadd.f32 %v898, %v1020
      %v1022 = vpop.f32.mrf.mxu0
      %1023 = vmatprep.mubr.f32.mxu0 0.0
      %v1024 = vand.u32 %v451, 4294901760
      %1025 = vmatmul.mubr.f32.gmra.mxu0 %v1024
      %v1026 = vpop.f32.mrf.mxu0
      %v1027 = vadd.f32 %v906, %v1026
      %v1028 = vpop.f32.mrf.mxu0
      %1029 = vmatprep.mubr.f32.mxu0 0.0
      %v1030 = vand.u32 %v454, 4294901760
      %1031 = vmatmul.mubr.f32.gmra.mxu0 %v1030
      %v1032 = vpop.f32.mrf.mxu0
      %v1033 = vadd.f32 %v914, %v1032
      %v1034 = vpop.f32.mrf.mxu0
      %1035 = vdwg.mxu0
      %1036 = vmatprep.subr.mxu0 0.0
      %1037 = vmatpush1.msra.mxu0 0.0
      %1038 = vmatprep.subr.mxu0 0.0
      %1039 = vmatpush1.msra.mxu0 0.0
      %1040 = vmatprep.subr.mxu0 0.0
      %1041 = vmatpush1.msra.mxu0 0.0
      %1042 = vmatprep.subr.mxu0 0.0
      %1043 = vmatpush1.msra.mxu0 0.0
      %1044 = vmatprep.subr.mxu0 0.0
      %v1045 = vand.u32 %v438, 4294901760
      %1046 = vmatpush1.msra.mxu0 %v1045
      %1047 = vmatprep.subr.mxu0 0.0
      %v1048 = vand.u32 %v437, 4294901760
      %1049 = vmatpush1.msra.mxu0 %v1048
      %1050 = vmatprep.subr.mxu0 0.0
      %v1051 = vand.u32 %v436, 4294901760
      %1052 = vmatpush1.msra.mxu0 %v1051
      %1053 = vmatprep.subr.mxu0 0.0
      %v1054 = vand.u32 %v435, 4294901760
      %1055 = vmatpush1.msra.mxu0 %v1054
      %1056 = vmatprep.subr.mxu0 0.0
      %v1057 = vand.u32 %v434, 4294901760
      %1058 = vmatpush1.msra.mxu0 %v1057
      %1059 = vmatprep.subr.mxu0 0.0
      %v1060 = vand.u32 %v433, 4294901760
      %1061 = vmatpush1.msra.mxu0 %v1060
      %1062 = vmatprep.subr.mxu0 0.0
      %v1063 = vand.u32 %v432, 4294901760
      %1064 = vmatpush1.msra.mxu0 %v1063
      %1065 = vmatprep.subr.mxu0 0.0
      %v1066 = vand.u32 %v431, 4294901760
      %1067 = vmatpush1.msra.mxu0 %v1066
      %1068 = vmatprep.subr.mxu0 0.0
      %v1069 = vand.u32 %v430, 4294901760
      %1070 = vmatpush1.msra.mxu0 %v1069
      %1071 = vmatprep.subr.mxu0 0.0
      %v1072 = vand.u32 %v429, 4294901760
      %1073 = vmatpush1.msra.mxu0 %v1072
      %1074 = vmatprep.subr.mxu0 0.0
      %v1075 = vand.u32 %v428, 4294901760
      %1076 = vmatpush1.msra.mxu0 %v1075
      %1077 = vmatprep.subr.mxu0 0.0
      %v1078 = vand.u32 %v427, 4294901760
      %1079 = vmatpush1.msra.mxu0 %v1078
      %1080 = vmatprep.subr.mxu0 0.0
      %1081 = vmatpush2.msra.mxu0 0.0
      %1082 = vmatprep.subr.mxu0 0.0
      %1083 = vmatpush2.msra.mxu0 0.0
      %1084 = vmatprep.subr.mxu0 0.0
      %1085 = vmatpush2.msra.mxu0 0.0
      %1086 = vmatprep.subr.mxu0 0.0
      %1087 = vmatpush2.msra.mxu0 0.0
      %1088 = vmatprep.subr.mxu0 0.0
      %1089 = vmatpush2.msra.mxu0 0.0
      %1090 = vmatprep.subr.mxu0 0.0
      %1091 = vmatpush2.msra.mxu0 0.0
      %1092 = vmatprep.subr.mxu0 0.0
      %1093 = vmatpush2.msra.mxu0 0.0
      %1094 = vmatprep.subr.mxu0 0.0
      %1095 = vmatpush2.msra.mxu0 0.0
      %1096 = vmatprep.subr.mxu0 0.0
      %1097 = vmatpush2.msra.mxu0 0.0
      %1098 = vmatprep.subr.mxu0 0.0
      %1099 = vmatpush2.msra.mxu0 0.0
      %1100 = vmatprep.subr.mxu0 0.0
      %1101 = vmatpush2.msra.mxu0 0.0
      %1102 = vmatprep.subr.mxu0 0.0
      %1103 = vmatpush2.msra.mxu0 0.0
      %1104 = vmatprep.subr.mxu0 0.0
      %1105 = vmatpush2.msra.mxu0 0.0
      %1106 = vmatprep.subr.mxu0 0.0
      %1107 = vmatpush2.msra.mxu0 0.0
      %1108 = vmatprep.subr.mxu0 0.0
      %1109 = vmatpush2.msra.mxu0 0.0
      %1110 = vmatprep.subr.mxu0 0.0
      %1111 = vmatpush2.msra.mxu0 0.0
      %1112 = vmatprep.mubr.f32.mxu0 0.0
      %v1113 = vand.u32 %v448, 4294901760
      %1114 = vmatmul.mubr.f32.gmra.mxu0 %v1113
      %v1115 = vpop.f32.mrf.mxu0
      %v1116 = vadd.f32 %v1021, %v1115
      %v1117 = vpop.f32.mrf.mxu0
      %1118 = vmatprep.mubr.f32.mxu0 0.0
      %v1119 = vand.u32 %v451, 4294901760
      %1120 = vmatmul.mubr.f32.gmra.mxu0 %v1119
      %v1121 = vpop.f32.mrf.mxu0
      %v1122 = vadd.f32 %v1027, %v1121
      %v1123 = vpop.f32.mrf.mxu0
      %1124 = vmatprep.mubr.f32.mxu0 0.0
      %v1125 = vand.u32 %v454, 4294901760
      %1126 = vmatmul.mubr.f32.gmra.mxu0 %v1125
      %v1127 = vpop.f32.mrf.mxu0
      %v1128 = vadd.f32 %v1033, %v1127
      %v1129 = vpop.f32.mrf.mxu0
      %1130 = vdwg.mxu0
      %v1131 = vmul.f32 %v1116, %v363
      %v1132 = vmul.f32 %v1122, %v368
      %v1133 = vmul.f32 %v1128, %v373
      %v1134 = vmax.f32 %v1131, 0.0
      %v1135 = vmax.f32 %v1132, 0.0
      %v1136 = vmax.f32 %v1133, 0.0
      %v1137 = vrot.slane %v1134, 7
      %v1138 = vrot.slane %v1135, 7
      %v1139 = vrot.slane %v1136, 7
      %v1140 = vsel %vm378, %v1138, %v1139
      %v1141 = vsel %vm378, %v1137, %v1138
      %v1142 = vsel %vm378, %v1139, %v1137
      %v1143 = vmul.f32 %v1142, %v354
      %v1144 = vmul.f32 %v1141, %v355
      %v1145 = vmul.f32 %v1140, %v356
      %v1146 = vrot.slane %v1134, 1
      %v1147 = vrot.slane %v1135, 1
      %v1148 = vrot.slane %v1136, 1
      %v1149 = vsel %vm388, %v1147, %v1148
      %v1150 = vsel %vm388, %v1146, %v1147
      %v1151 = vsel %vm388, %v1148, %v1146
      %v1152 = vmul.f32 %v1150, %v357
      %v1153 = vmul.f32 %v1149, %v358
      %v1154 = vmul.f32 %v1151, %v359
      %1158 = vrot.lane.b32.xlu0 %v1134, 32
      %v1159 = vpop.permute.xlu0 %1158
      %1160 = vrot.lane.b32.xlu0 %v1135, 32
      %v1161 = vpop.permute.xlu0 %1160
      %1162 = vrot.lane.b32.xlu0 %v1136, 32
      %v1163 = vpop.permute.xlu0 %1162
      %1170 = vrot.lane.b32.xlu0 %v1152, 64
      %v1171 = vpop.permute.xlu0 %1170
      %1172 = vrot.lane.b32.xlu0 %v1153, 64
      %v1173 = vpop.permute.xlu0 %1172
      %1174 = vrot.lane.b32.xlu0 %v1154, 64
      %v1175 = vpop.permute.xlu0 %1174
      %v1179 = vsel %vm419, %v1143, %v1159
      %v1180 = vsel %vm419, %v1144, %v1161
      %v1181 = vsel %vm419, %v1145, %v1163
      %v1182 = vsel %vm423, %v1179, %v1171
      %v1183 = vsel %vm423, %v1180, %v1173
      %v1184 = vsel %vm423, %v1181, %v1175
      %v1185 = vld [vmem:[%s4] sm:$0xff]
      %v1186 = vld [vmem:[%s4 + $0x8] sm:$0xff]
      %v1187 = vld [vmem:[%s4 + $0x10] sm:$0xff]
      %v1188 = vld [vmem:[%s4 + $0x18] sm:$0xff]
      %v1189 = vld [vmem:[%s4 + $0x20] sm:$0xff]
      %v1190 = vld [vmem:[%s4 + $0x28] sm:$0xff]
      %v1191 = vld [vmem:[%s4 + $0x30] sm:$0xff]
      %v1192 = vld [vmem:[%s4 + $0x38] sm:$0xff]
      %v1193 = vld [vmem:[%s4 + $0x40] sm:$0xff]
      %v1194 = vld [vmem:[%s4 + $0x48] sm:$0xff]
      %v1195 = vld [vmem:[%s4 + $0x50] sm:$0xff]
      %v1196 = vld [vmem:[%s4 + $0x58] sm:$0xff]
      %v1197 = vld [vmem:[%s5] sm:$0x1]
      %v1199 = vlaneseq
      %v1200 = vshrl.u32 %v1199, 7
      %v1201 = vsub.s32 0, %v1200
      %v1202 = vrot.slane %v1197, %v1201
      %v1205 = vsel %vm446, %v1182, 0
      %v1208 = vsel %vm446, %v1183, 0
      %v1211 = vsel %vm446, %v1184, 0
      %1213 = vmatprep.subr.mxu0 0.0
      %1214 = vmatpush1.msra.mxu0 0.0
      %1215 = vmatprep.subr.mxu0 0.0
      %1216 = vmatpush1.msra.mxu0 0.0
      %1217 = vmatprep.subr.mxu0 0.0
      %1218 = vmatpush1.msra.mxu0 0.0
      %1219 = vmatprep.subr.mxu0 0.0
      %1220 = vmatpush1.msra.mxu0 0.0
      %1221 = vmatprep.subr.mxu0 0.0
      %v1222 = vand.u32 %v1196, 4294901760
      %1223 = vmatpush1.msra.mxu0 %v1222
      %1224 = vmatprep.subr.mxu0 0.0
      %v1225 = vand.u32 %v1195, 4294901760
      %1226 = vmatpush1.msra.mxu0 %v1225
      %1227 = vmatprep.subr.mxu0 0.0
      %v1228 = vand.u32 %v1194, 4294901760
      %1229 = vmatpush1.msra.mxu0 %v1228
      %1230 = vmatprep.subr.mxu0 0.0
      %v1231 = vand.u32 %v1193, 4294901760
      %1232 = vmatpush1.msra.mxu0 %v1231
      %1233 = vmatprep.subr.mxu0 0.0
      %v1234 = vand.u32 %v1192, 4294901760
      %1235 = vmatpush1.msra.mxu0 %v1234
      %1236 = vmatprep.subr.mxu0 0.0
      %v1237 = vand.u32 %v1191, 4294901760
      %1238 = vmatpush1.msra.mxu0 %v1237
      %1239 = vmatprep.subr.mxu0 0.0
      %v1240 = vand.u32 %v1190, 4294901760
      %1241 = vmatpush1.msra.mxu0 %v1240
      %1242 = vmatprep.subr.mxu0 0.0
      %v1243 = vand.u32 %v1189, 4294901760
      %1244 = vmatpush1.msra.mxu0 %v1243
      %1245 = vmatprep.subr.mxu0 0.0
      %v1246 = vand.u32 %v1188, 4294901760
      %1247 = vmatpush1.msra.mxu0 %v1246
      %1248 = vmatprep.subr.mxu0 0.0
      %v1249 = vand.u32 %v1187, 4294901760
      %1250 = vmatpush1.msra.mxu0 %v1249
      %1251 = vmatprep.subr.mxu0 0.0
      %v1252 = vand.u32 %v1186, 4294901760
      %1253 = vmatpush1.msra.mxu0 %v1252
      %1254 = vmatprep.subr.mxu0 0.0
      %v1255 = vand.u32 %v1185, 4294901760
      %1256 = vmatpush1.msra.mxu0 %v1255
      %1257 = vmatprep.subr.mxu0 0.0
      %1258 = vmatpush2.msra.mxu0 0.0
      %1259 = vmatprep.subr.mxu0 0.0
      %1260 = vmatpush2.msra.mxu0 0.0
      %1261 = vmatprep.subr.mxu0 0.0
      %1262 = vmatpush2.msra.mxu0 0.0
      %1263 = vmatprep.subr.mxu0 0.0
      %1264 = vmatpush2.msra.mxu0 0.0
      %1265 = vmatprep.subr.mxu0 0.0
      %1266 = vmatpush2.msra.mxu0 0.0
      %1267 = vmatprep.subr.mxu0 0.0
      %1268 = vmatpush2.msra.mxu0 0.0
      %1269 = vmatprep.subr.mxu0 0.0
      %1270 = vmatpush2.msra.mxu0 0.0
      %1271 = vmatprep.subr.mxu0 0.0
      %1272 = vmatpush2.msra.mxu0 0.0
      %1273 = vmatprep.subr.mxu0 0.0
      %1274 = vmatpush2.msra.mxu0 0.0
      %1275 = vmatprep.subr.mxu0 0.0
      %1276 = vmatpush2.msra.mxu0 0.0
      %1277 = vmatprep.subr.mxu0 0.0
      %1278 = vmatpush2.msra.mxu0 0.0
      %1279 = vmatprep.subr.mxu0 0.0
      %1280 = vmatpush2.msra.mxu0 0.0
      %1281 = vmatprep.subr.mxu0 0.0
      %1282 = vmatpush2.msra.mxu0 0.0
      %1283 = vmatprep.subr.mxu0 0.0
      %1284 = vmatpush2.msra.mxu0 0.0
      %1285 = vmatprep.subr.mxu0 0.0
      %1286 = vmatpush2.msra.mxu0 0.0
      %1287 = vmatprep.subr.mxu0 0.0
      %1288 = vmatpush2.msra.mxu0 0.0
      %1289 = vmatprep.mubr.f32.mxu0 0.0
      %v1290 = vand.u32 %v1205, 4294901760
      %v1291 = vsub.f32 %v1205, %v1290
      %v1292 = vand.u32 %v1291, 4294901760
      %v1293 = vsub.f32 %v1291, %v1292
      %v1294 = vand.u32 %v1293, 4294901760
      %1295 = vmatmul.mubr.f32.gmra.mxu0 %v1294
      %v1296 = vpop.f32.mrf.mxu0
      %v1297 = vadd.f32 %v1202, %v1296
      %v1298 = vpop.f32.mrf.mxu0
      %1299 = vmatprep.mubr.f32.mxu0 0.0
      %v1300 = vand.u32 %v1208, 4294901760
      %v1301 = vsub.f32 %v1208, %v1300
      %v1302 = vand.u32 %v1301, 4294901760
      %v1303 = vsub.f32 %v1301, %v1302
      %v1304 = vand.u32 %v1303, 4294901760
      %1305 = vmatmul.mubr.f32.gmra.mxu0 %v1304
      %v1306 = vpop.f32.mrf.mxu0
      %v1307 = vadd.f32 %v1202, %v1306
      %v1308 = vpop.f32.mrf.mxu0
      %1309 = vmatprep.mubr.f32.mxu0 0.0
      %v1310 = vand.u32 %v1211, 4294901760
      %v1311 = vsub.f32 %v1211, %v1310
      %v1312 = vand.u32 %v1311, 4294901760
      %v1313 = vsub.f32 %v1311, %v1312
      %v1314 = vand.u32 %v1313, 4294901760
      %1315 = vmatmul.mubr.f32.gmra.mxu0 %v1314
      %v1316 = vpop.f32.mrf.mxu0
      %v1317 = vadd.f32 %v1202, %v1316
      %v1318 = vpop.f32.mrf.mxu0
      %1319 = vdwg.mxu0
      %1320 = vmatprep.subr.mxu0 0.0
      %1321 = vmatpush1.msra.mxu0 0.0
      %1322 = vmatprep.subr.mxu0 0.0
      %1323 = vmatpush1.msra.mxu0 0.0
      %1324 = vmatprep.subr.mxu0 0.0
      %1325 = vmatpush1.msra.mxu0 0.0
      %1326 = vmatprep.subr.mxu0 0.0
      %1327 = vmatpush1.msra.mxu0 0.0
      %1328 = vmatprep.subr.mxu0 0.0
      %v1329 = vand.u32 %v1196, 4294901760
      %v1330 = vsub.f32 %v1196, %v1329
      %v1331 = vand.u32 %v1330, 4294901760
      %v1332 = vsub.f32 %v1330, %v1331
      %v1333 = vand.u32 %v1332, 4294901760
      %1334 = vmatpush1.msra.mxu0 %v1333
      %1335 = vmatprep.subr.mxu0 0.0
      %v1336 = vand.u32 %v1195, 4294901760
      %v1337 = vsub.f32 %v1195, %v1336
      %v1338 = vand.u32 %v1337, 4294901760
      %v1339 = vsub.f32 %v1337, %v1338
      %v1340 = vand.u32 %v1339, 4294901760
      %1341 = vmatpush1.msra.mxu0 %v1340
      %1342 = vmatprep.subr.mxu0 0.0
      %v1343 = vand.u32 %v1194, 4294901760
      %v1344 = vsub.f32 %v1194, %v1343
      %v1345 = vand.u32 %v1344, 4294901760
      %v1346 = vsub.f32 %v1344, %v1345
      %v1347 = vand.u32 %v1346, 4294901760
      %1348 = vmatpush1.msra.mxu0 %v1347
      %1349 = vmatprep.subr.mxu0 0.0
      %v1350 = vand.u32 %v1193, 4294901760
      %v1351 = vsub.f32 %v1193, %v1350
      %v1352 = vand.u32 %v1351, 4294901760
      %v1353 = vsub.f32 %v1351, %v1352
      %v1354 = vand.u32 %v1353, 4294901760
      %1355 = vmatpush1.msra.mxu0 %v1354
      %1356 = vmatprep.subr.mxu0 0.0
      %v1357 = vand.u32 %v1192, 4294901760
      %v1358 = vsub.f32 %v1192, %v1357
      %v1359 = vand.u32 %v1358, 4294901760
      %v1360 = vsub.f32 %v1358, %v1359
      %v1361 = vand.u32 %v1360, 4294901760
      %1362 = vmatpush1.msra.mxu0 %v1361
      %1363 = vmatprep.subr.mxu0 0.0
      %v1364 = vand.u32 %v1191, 4294901760
      %v1365 = vsub.f32 %v1191, %v1364
      %v1366 = vand.u32 %v1365, 4294901760
      %v1367 = vsub.f32 %v1365, %v1366
      %v1368 = vand.u32 %v1367, 4294901760
      %1369 = vmatpush1.msra.mxu0 %v1368
      %1370 = vmatprep.subr.mxu0 0.0
      %v1371 = vand.u32 %v1190, 4294901760
      %v1372 = vsub.f32 %v1190, %v1371
      %v1373 = vand.u32 %v1372, 4294901760
      %v1374 = vsub.f32 %v1372, %v1373
      %v1375 = vand.u32 %v1374, 4294901760
      %1376 = vmatpush1.msra.mxu0 %v1375
      %1377 = vmatprep.subr.mxu0 0.0
      %v1378 = vand.u32 %v1189, 4294901760
      %v1379 = vsub.f32 %v1189, %v1378
      %v1380 = vand.u32 %v1379, 4294901760
      %v1381 = vsub.f32 %v1379, %v1380
      %v1382 = vand.u32 %v1381, 4294901760
      %1383 = vmatpush1.msra.mxu0 %v1382
      %1384 = vmatprep.subr.mxu0 0.0
      %v1385 = vand.u32 %v1188, 4294901760
      %v1386 = vsub.f32 %v1188, %v1385
      %v1387 = vand.u32 %v1386, 4294901760
      %v1388 = vsub.f32 %v1386, %v1387
      %v1389 = vand.u32 %v1388, 4294901760
      %1390 = vmatpush1.msra.mxu0 %v1389
      %1391 = vmatprep.subr.mxu0 0.0
      %v1392 = vand.u32 %v1187, 4294901760
      %v1393 = vsub.f32 %v1187, %v1392
      %v1394 = vand.u32 %v1393, 4294901760
      %v1395 = vsub.f32 %v1393, %v1394
      %v1396 = vand.u32 %v1395, 4294901760
      %1397 = vmatpush1.msra.mxu0 %v1396
      %1398 = vmatprep.subr.mxu0 0.0
      %v1399 = vand.u32 %v1186, 4294901760
      %v1400 = vsub.f32 %v1186, %v1399
      %v1401 = vand.u32 %v1400, 4294901760
      %v1402 = vsub.f32 %v1400, %v1401
      %v1403 = vand.u32 %v1402, 4294901760
      %1404 = vmatpush1.msra.mxu0 %v1403
      %1405 = vmatprep.subr.mxu0 0.0
      %v1406 = vand.u32 %v1185, 4294901760
      %v1407 = vsub.f32 %v1185, %v1406
      %v1408 = vand.u32 %v1407, 4294901760
      %v1409 = vsub.f32 %v1407, %v1408
      %v1410 = vand.u32 %v1409, 4294901760
      %1411 = vmatpush1.msra.mxu0 %v1410
      %1412 = vmatprep.subr.mxu0 0.0
      %1413 = vmatpush2.msra.mxu0 0.0
      %1414 = vmatprep.subr.mxu0 0.0
      %1415 = vmatpush2.msra.mxu0 0.0
      %1416 = vmatprep.subr.mxu0 0.0
      %1417 = vmatpush2.msra.mxu0 0.0
      %1418 = vmatprep.subr.mxu0 0.0
      %1419 = vmatpush2.msra.mxu0 0.0
      %1420 = vmatprep.subr.mxu0 0.0
      %1421 = vmatpush2.msra.mxu0 0.0
      %1422 = vmatprep.subr.mxu0 0.0
      %1423 = vmatpush2.msra.mxu0 0.0
      %1424 = vmatprep.subr.mxu0 0.0
      %1425 = vmatpush2.msra.mxu0 0.0
      %1426 = vmatprep.subr.mxu0 0.0
      %1427 = vmatpush2.msra.mxu0 0.0
      %1428 = vmatprep.subr.mxu0 0.0
      %1429 = vmatpush2.msra.mxu0 0.0
      %1430 = vmatprep.subr.mxu0 0.0
      %1431 = vmatpush2.msra.mxu0 0.0
      %1432 = vmatprep.subr.mxu0 0.0
      %1433 = vmatpush2.msra.mxu0 0.0
      %1434 = vmatprep.subr.mxu0 0.0
      %1435 = vmatpush2.msra.mxu0 0.0
      %1436 = vmatprep.subr.mxu0 0.0
      %1437 = vmatpush2.msra.mxu0 0.0
      %1438 = vmatprep.subr.mxu0 0.0
      %1439 = vmatpush2.msra.mxu0 0.0
      %1440 = vmatprep.subr.mxu0 0.0
      %1441 = vmatpush2.msra.mxu0 0.0
      %1442 = vmatprep.subr.mxu0 0.0
      %1443 = vmatpush2.msra.mxu0 0.0
      %1444 = vmatprep.mubr.f32.mxu0 0.0
      %v1445 = vand.u32 %v1205, 4294901760
      %1446 = vmatmul.mubr.f32.gmra.mxu0 %v1445
      %v1447 = vpop.f32.mrf.mxu0
      %v1448 = vadd.f32 %v1297, %v1447
      %v1449 = vpop.f32.mrf.mxu0
      %1450 = vmatprep.mubr.f32.mxu0 0.0
      %v1451 = vand.u32 %v1208, 4294901760
      %1452 = vmatmul.mubr.f32.gmra.mxu0 %v1451
      %v1453 = vpop.f32.mrf.mxu0
      %v1454 = vadd.f32 %v1307, %v1453
      %v1455 = vpop.f32.mrf.mxu0
      %1456 = vmatprep.mubr.f32.mxu0 0.0
      %v1457 = vand.u32 %v1211, 4294901760
      %1458 = vmatmul.mubr.f32.gmra.mxu0 %v1457
      %v1459 = vpop.f32.mrf.mxu0
      %v1460 = vadd.f32 %v1317, %v1459
      %v1461 = vpop.f32.mrf.mxu0
      %1462 = vdwg.mxu0
      %1463 = vmatprep.subr.mxu0 0.0
      %1464 = vmatpush1.msra.mxu0 0.0
      %1465 = vmatprep.subr.mxu0 0.0
      %1466 = vmatpush1.msra.mxu0 0.0
      %1467 = vmatprep.subr.mxu0 0.0
      %1468 = vmatpush1.msra.mxu0 0.0
      %1469 = vmatprep.subr.mxu0 0.0
      %1470 = vmatpush1.msra.mxu0 0.0
      %1471 = vmatprep.subr.mxu0 0.0
      %v1472 = vand.u32 %v1196, 4294901760
      %v1473 = vsub.f32 %v1196, %v1472
      %1474 = vmatpush1.msra.mxu0 %v1473
      %1475 = vmatprep.subr.mxu0 0.0
      %v1476 = vand.u32 %v1195, 4294901760
      %v1477 = vsub.f32 %v1195, %v1476
      %1478 = vmatpush1.msra.mxu0 %v1477
      %1479 = vmatprep.subr.mxu0 0.0
      %v1480 = vand.u32 %v1194, 4294901760
      %v1481 = vsub.f32 %v1194, %v1480
      %1482 = vmatpush1.msra.mxu0 %v1481
      %1483 = vmatprep.subr.mxu0 0.0
      %v1484 = vand.u32 %v1193, 4294901760
      %v1485 = vsub.f32 %v1193, %v1484
      %1486 = vmatpush1.msra.mxu0 %v1485
      %1487 = vmatprep.subr.mxu0 0.0
      %v1488 = vand.u32 %v1192, 4294901760
      %v1489 = vsub.f32 %v1192, %v1488
      %1490 = vmatpush1.msra.mxu0 %v1489
      %1491 = vmatprep.subr.mxu0 0.0
      %v1492 = vand.u32 %v1191, 4294901760
      %v1493 = vsub.f32 %v1191, %v1492
      %1494 = vmatpush1.msra.mxu0 %v1493
      %1495 = vmatprep.subr.mxu0 0.0
      %v1496 = vand.u32 %v1190, 4294901760
      %v1497 = vsub.f32 %v1190, %v1496
      %1498 = vmatpush1.msra.mxu0 %v1497
      %1499 = vmatprep.subr.mxu0 0.0
      %v1500 = vand.u32 %v1189, 4294901760
      %v1501 = vsub.f32 %v1189, %v1500
      %1502 = vmatpush1.msra.mxu0 %v1501
      %1503 = vmatprep.subr.mxu0 0.0
      %v1504 = vand.u32 %v1188, 4294901760
      %v1505 = vsub.f32 %v1188, %v1504
      %1506 = vmatpush1.msra.mxu0 %v1505
      %1507 = vmatprep.subr.mxu0 0.0
      %v1508 = vand.u32 %v1187, 4294901760
      %v1509 = vsub.f32 %v1187, %v1508
      %1510 = vmatpush1.msra.mxu0 %v1509
      %1511 = vmatprep.subr.mxu0 0.0
      %v1512 = vand.u32 %v1186, 4294901760
      %v1513 = vsub.f32 %v1186, %v1512
      %1514 = vmatpush1.msra.mxu0 %v1513
      %1515 = vmatprep.subr.mxu0 0.0
      %v1516 = vand.u32 %v1185, 4294901760
      %v1517 = vsub.f32 %v1185, %v1516
      %1518 = vmatpush1.msra.mxu0 %v1517
      %1519 = vmatprep.subr.mxu0 0.0
      %1520 = vmatpush2.msra.mxu0 0.0
      %1521 = vmatprep.subr.mxu0 0.0
      %1522 = vmatpush2.msra.mxu0 0.0
      %1523 = vmatprep.subr.mxu0 0.0
      %1524 = vmatpush2.msra.mxu0 0.0
      %1525 = vmatprep.subr.mxu0 0.0
      %1526 = vmatpush2.msra.mxu0 0.0
      %1527 = vmatprep.subr.mxu0 0.0
      %1528 = vmatpush2.msra.mxu0 0.0
      %1529 = vmatprep.subr.mxu0 0.0
      %1530 = vmatpush2.msra.mxu0 0.0
      %1531 = vmatprep.subr.mxu0 0.0
      %1532 = vmatpush2.msra.mxu0 0.0
      %1533 = vmatprep.subr.mxu0 0.0
      %1534 = vmatpush2.msra.mxu0 0.0
      %1535 = vmatprep.subr.mxu0 0.0
      %1536 = vmatpush2.msra.mxu0 0.0
      %1537 = vmatprep.subr.mxu0 0.0
      %1538 = vmatpush2.msra.mxu0 0.0
      %1539 = vmatprep.subr.mxu0 0.0
      %1540 = vmatpush2.msra.mxu0 0.0
      %1541 = vmatprep.subr.mxu0 0.0
      %1542 = vmatpush2.msra.mxu0 0.0
      %1543 = vmatprep.subr.mxu0 0.0
      %1544 = vmatpush2.msra.mxu0 0.0
      %1545 = vmatprep.subr.mxu0 0.0
      %1546 = vmatpush2.msra.mxu0 0.0
      %1547 = vmatprep.subr.mxu0 0.0
      %1548 = vmatpush2.msra.mxu0 0.0
      %1549 = vmatprep.subr.mxu0 0.0
      %1550 = vmatpush2.msra.mxu0 0.0
      %1551 = vmatprep.mubr.f32.mxu0 0.0
      %v1552 = vand.u32 %v1205, 4294901760
      %v1553 = vsub.f32 %v1205, %v1552
      %1554 = vmatmul.mubr.f32.gmra.mxu0 %v1553
      %v1555 = vpop.f32.mrf.mxu0
      %v1556 = vadd.f32 %v1448, %v1555
      %v1557 = vpop.f32.mrf.mxu0
      %1558 = vmatprep.mubr.f32.mxu0 0.0
      %v1559 = vand.u32 %v1208, 4294901760
      %v1560 = vsub.f32 %v1208, %v1559
      %1561 = vmatmul.mubr.f32.gmra.mxu0 %v1560
      %v1562 = vpop.f32.mrf.mxu0
      %v1563 = vadd.f32 %v1454, %v1562
      %v1564 = vpop.f32.mrf.mxu0
      %1565 = vmatprep.mubr.f32.mxu0 0.0
      %v1566 = vand.u32 %v1211, 4294901760
      %v1567 = vsub.f32 %v1211, %v1566
      %1568 = vmatmul.mubr.f32.gmra.mxu0 %v1567
      %v1569 = vpop.f32.mrf.mxu0
      %v1570 = vadd.f32 %v1460, %v1569
      %v1571 = vpop.f32.mrf.mxu0
      %1572 = vdwg.mxu0
      %1573 = vmatprep.subr.mxu0 0.0
      %1574 = vmatpush1.msra.mxu0 0.0
      %1575 = vmatprep.subr.mxu0 0.0
      %1576 = vmatpush1.msra.mxu0 0.0
      %1577 = vmatprep.subr.mxu0 0.0
      %1578 = vmatpush1.msra.mxu0 0.0
      %1579 = vmatprep.subr.mxu0 0.0
      %1580 = vmatpush1.msra.mxu0 0.0
      %1581 = vmatprep.subr.mxu0 0.0
      %v1582 = vand.u32 %v1196, 4294901760
      %1583 = vmatpush1.msra.mxu0 %v1582
      %1584 = vmatprep.subr.mxu0 0.0
      %v1585 = vand.u32 %v1195, 4294901760
      %1586 = vmatpush1.msra.mxu0 %v1585
      %1587 = vmatprep.subr.mxu0 0.0
      %v1588 = vand.u32 %v1194, 4294901760
      %1589 = vmatpush1.msra.mxu0 %v1588
      %1590 = vmatprep.subr.mxu0 0.0
      %v1591 = vand.u32 %v1193, 4294901760
      %1592 = vmatpush1.msra.mxu0 %v1591
      %1593 = vmatprep.subr.mxu0 0.0
      %v1594 = vand.u32 %v1192, 4294901760
      %1595 = vmatpush1.msra.mxu0 %v1594
      %1596 = vmatprep.subr.mxu0 0.0
      %v1597 = vand.u32 %v1191, 4294901760
      %1598 = vmatpush1.msra.mxu0 %v1597
      %1599 = vmatprep.subr.mxu0 0.0
      %v1600 = vand.u32 %v1190, 4294901760
      %1601 = vmatpush1.msra.mxu0 %v1600
      %1602 = vmatprep.subr.mxu0 0.0
      %v1603 = vand.u32 %v1189, 4294901760
      %1604 = vmatpush1.msra.mxu0 %v1603
      %1605 = vmatprep.subr.mxu0 0.0
      %v1606 = vand.u32 %v1188, 4294901760
      %1607 = vmatpush1.msra.mxu0 %v1606
      %1608 = vmatprep.subr.mxu0 0.0
      %v1609 = vand.u32 %v1187, 4294901760
      %1610 = vmatpush1.msra.mxu0 %v1609
      %1611 = vmatprep.subr.mxu0 0.0
      %v1612 = vand.u32 %v1186, 4294901760
      %1613 = vmatpush1.msra.mxu0 %v1612
      %1614 = vmatprep.subr.mxu0 0.0
      %v1615 = vand.u32 %v1185, 4294901760
      %1616 = vmatpush1.msra.mxu0 %v1615
      %1617 = vmatprep.subr.mxu0 0.0
      %1618 = vmatpush2.msra.mxu0 0.0
      %1619 = vmatprep.subr.mxu0 0.0
      %1620 = vmatpush2.msra.mxu0 0.0
      %1621 = vmatprep.subr.mxu0 0.0
      %1622 = vmatpush2.msra.mxu0 0.0
      %1623 = vmatprep.subr.mxu0 0.0
      %1624 = vmatpush2.msra.mxu0 0.0
      %1625 = vmatprep.subr.mxu0 0.0
      %1626 = vmatpush2.msra.mxu0 0.0
      %1627 = vmatprep.subr.mxu0 0.0
      %1628 = vmatpush2.msra.mxu0 0.0
      %1629 = vmatprep.subr.mxu0 0.0
      %1630 = vmatpush2.msra.mxu0 0.0
      %1631 = vmatprep.subr.mxu0 0.0
      %1632 = vmatpush2.msra.mxu0 0.0
      %1633 = vmatprep.subr.mxu0 0.0
      %1634 = vmatpush2.msra.mxu0 0.0
      %1635 = vmatprep.subr.mxu0 0.0
      %1636 = vmatpush2.msra.mxu0 0.0
      %1637 = vmatprep.subr.mxu0 0.0
      %1638 = vmatpush2.msra.mxu0 0.0
      %1639 = vmatprep.subr.mxu0 0.0
      %1640 = vmatpush2.msra.mxu0 0.0
      %1641 = vmatprep.subr.mxu0 0.0
      %1642 = vmatpush2.msra.mxu0 0.0
      %1643 = vmatprep.subr.mxu0 0.0
      %1644 = vmatpush2.msra.mxu0 0.0
      %1645 = vmatprep.subr.mxu0 0.0
      %1646 = vmatpush2.msra.mxu0 0.0
      %1647 = vmatprep.subr.mxu0 0.0
      %1648 = vmatpush2.msra.mxu0 0.0
      %1649 = vmatprep.mubr.f32.mxu0 0.0
      %v1650 = vand.u32 %v1205, 4294901760
      %v1651 = vsub.f32 %v1205, %v1650
      %v1652 = vand.u32 %v1651, 4294901760
      %1653 = vmatmul.mubr.f32.gmra.mxu0 %v1652
      %v1654 = vpop.f32.mrf.mxu0
      %v1655 = vadd.f32 %v1556, %v1654
      %v1656 = vpop.f32.mrf.mxu0
      %1657 = vmatprep.mubr.f32.mxu0 0.0
      %v1658 = vand.u32 %v1208, 4294901760
      %v1659 = vsub.f32 %v1208, %v1658
      %v1660 = vand.u32 %v1659, 4294901760
      %1661 = vmatmul.mubr.f32.gmra.mxu0 %v1660
      %v1662 = vpop.f32.mrf.mxu0
      %v1663 = vadd.f32 %v1563, %v1662
      %v1664 = vpop.f32.mrf.mxu0
      %1665 = vmatprep.mubr.f32.mxu0 0.0
      %v1666 = vand.u32 %v1211, 4294901760
      %v1667 = vsub.f32 %v1211, %v1666
      %v1668 = vand.u32 %v1667, 4294901760
      %1669 = vmatmul.mubr.f32.gmra.mxu0 %v1668
      %v1670 = vpop.f32.mrf.mxu0
      %v1671 = vadd.f32 %v1570, %v1670
      %v1672 = vpop.f32.mrf.mxu0
      %1673 = vdwg.mxu0
      %1674 = vmatprep.subr.mxu0 0.0
      %1675 = vmatpush1.msra.mxu0 0.0
      %1676 = vmatprep.subr.mxu0 0.0
      %1677 = vmatpush1.msra.mxu0 0.0
      %1678 = vmatprep.subr.mxu0 0.0
      %1679 = vmatpush1.msra.mxu0 0.0
      %1680 = vmatprep.subr.mxu0 0.0
      %1681 = vmatpush1.msra.mxu0 0.0
      %1682 = vmatprep.subr.mxu0 0.0
      %v1683 = vand.u32 %v1196, 4294901760
      %v1684 = vsub.f32 %v1196, %v1683
      %v1685 = vand.u32 %v1684, 4294901760
      %1686 = vmatpush1.msra.mxu0 %v1685
      %1687 = vmatprep.subr.mxu0 0.0
      %v1688 = vand.u32 %v1195, 4294901760
      %v1689 = vsub.f32 %v1195, %v1688
      %v1690 = vand.u32 %v1689, 4294901760
      %1691 = vmatpush1.msra.mxu0 %v1690
      %1692 = vmatprep.subr.mxu0 0.0
      %v1693 = vand.u32 %v1194, 4294901760
      %v1694 = vsub.f32 %v1194, %v1693
      %v1695 = vand.u32 %v1694, 4294901760
      %1696 = vmatpush1.msra.mxu0 %v1695
      %1697 = vmatprep.subr.mxu0 0.0
      %v1698 = vand.u32 %v1193, 4294901760
      %v1699 = vsub.f32 %v1193, %v1698
      %v1700 = vand.u32 %v1699, 4294901760
      %1701 = vmatpush1.msra.mxu0 %v1700
      %1702 = vmatprep.subr.mxu0 0.0
      %v1703 = vand.u32 %v1192, 4294901760
      %v1704 = vsub.f32 %v1192, %v1703
      %v1705 = vand.u32 %v1704, 4294901760
      %1706 = vmatpush1.msra.mxu0 %v1705
      %1707 = vmatprep.subr.mxu0 0.0
      %v1708 = vand.u32 %v1191, 4294901760
      %v1709 = vsub.f32 %v1191, %v1708
      %v1710 = vand.u32 %v1709, 4294901760
      %1711 = vmatpush1.msra.mxu0 %v1710
      %1712 = vmatprep.subr.mxu0 0.0
      %v1713 = vand.u32 %v1190, 4294901760
      %v1714 = vsub.f32 %v1190, %v1713
      %v1715 = vand.u32 %v1714, 4294901760
      %1716 = vmatpush1.msra.mxu0 %v1715
      %1717 = vmatprep.subr.mxu0 0.0
      %v1718 = vand.u32 %v1189, 4294901760
      %v1719 = vsub.f32 %v1189, %v1718
      %v1720 = vand.u32 %v1719, 4294901760
      %1721 = vmatpush1.msra.mxu0 %v1720
      %1722 = vmatprep.subr.mxu0 0.0
      %v1723 = vand.u32 %v1188, 4294901760
      %v1724 = vsub.f32 %v1188, %v1723
      %v1725 = vand.u32 %v1724, 4294901760
      %1726 = vmatpush1.msra.mxu0 %v1725
      %1727 = vmatprep.subr.mxu0 0.0
      %v1728 = vand.u32 %v1187, 4294901760
      %v1729 = vsub.f32 %v1187, %v1728
      %v1730 = vand.u32 %v1729, 4294901760
      %1731 = vmatpush1.msra.mxu0 %v1730
      %1732 = vmatprep.subr.mxu0 0.0
      %v1733 = vand.u32 %v1186, 4294901760
      %v1734 = vsub.f32 %v1186, %v1733
      %v1735 = vand.u32 %v1734, 4294901760
      %1736 = vmatpush1.msra.mxu0 %v1735
      %1737 = vmatprep.subr.mxu0 0.0
      %v1738 = vand.u32 %v1185, 4294901760
      %v1739 = vsub.f32 %v1185, %v1738
      %v1740 = vand.u32 %v1739, 4294901760
      %1741 = vmatpush1.msra.mxu0 %v1740
      %1742 = vmatprep.subr.mxu0 0.0
      %1743 = vmatpush2.msra.mxu0 0.0
      %1744 = vmatprep.subr.mxu0 0.0
      %1745 = vmatpush2.msra.mxu0 0.0
      %1746 = vmatprep.subr.mxu0 0.0
      %1747 = vmatpush2.msra.mxu0 0.0
      %1748 = vmatprep.subr.mxu0 0.0
      %1749 = vmatpush2.msra.mxu0 0.0
      %1750 = vmatprep.subr.mxu0 0.0
      %1751 = vmatpush2.msra.mxu0 0.0
      %1752 = vmatprep.subr.mxu0 0.0
      %1753 = vmatpush2.msra.mxu0 0.0
      %1754 = vmatprep.subr.mxu0 0.0
      %1755 = vmatpush2.msra.mxu0 0.0
      %1756 = vmatprep.subr.mxu0 0.0
      %1757 = vmatpush2.msra.mxu0 0.0
      %1758 = vmatprep.subr.mxu0 0.0
      %1759 = vmatpush2.msra.mxu0 0.0
      %1760 = vmatprep.subr.mxu0 0.0
      %1761 = vmatpush2.msra.mxu0 0.0
      %1762 = vmatprep.subr.mxu0 0.0
      %1763 = vmatpush2.msra.mxu0 0.0
      %1764 = vmatprep.subr.mxu0 0.0
      %1765 = vmatpush2.msra.mxu0 0.0
      %1766 = vmatprep.subr.mxu0 0.0
      %1767 = vmatpush2.msra.mxu0 0.0
      %1768 = vmatprep.subr.mxu0 0.0
      %1769 = vmatpush2.msra.mxu0 0.0
      %1770 = vmatprep.subr.mxu0 0.0
      %1771 = vmatpush2.msra.mxu0 0.0
      %1772 = vmatprep.subr.mxu0 0.0
      %1773 = vmatpush2.msra.mxu0 0.0
      %1774 = vmatprep.mubr.f32.mxu0 0.0
      %v1775 = vand.u32 %v1205, 4294901760
      %1776 = vmatmul.mubr.f32.gmra.mxu0 %v1775
      %v1777 = vpop.f32.mrf.mxu0
      %v1778 = vadd.f32 %v1655, %v1777
      %v1779 = vpop.f32.mrf.mxu0
      %1780 = vmatprep.mubr.f32.mxu0 0.0
      %v1781 = vand.u32 %v1208, 4294901760
      %1782 = vmatmul.mubr.f32.gmra.mxu0 %v1781
      %v1783 = vpop.f32.mrf.mxu0
      %v1784 = vadd.f32 %v1663, %v1783
      %v1785 = vpop.f32.mrf.mxu0
      %1786 = vmatprep.mubr.f32.mxu0 0.0
      %v1787 = vand.u32 %v1211, 4294901760
      %1788 = vmatmul.mubr.f32.gmra.mxu0 %v1787
      %v1789 = vpop.f32.mrf.mxu0
      %v1790 = vadd.f32 %v1671, %v1789
      %v1791 = vpop.f32.mrf.mxu0
      %1792 = vdwg.mxu0
      %1793 = vmatprep.subr.mxu0 0.0
      %1794 = vmatpush1.msra.mxu0 0.0
      %1795 = vmatprep.subr.mxu0 0.0
      %1796 = vmatpush1.msra.mxu0 0.0
      %1797 = vmatprep.subr.mxu0 0.0
      %1798 = vmatpush1.msra.mxu0 0.0
      %1799 = vmatprep.subr.mxu0 0.0
      %1800 = vmatpush1.msra.mxu0 0.0
      %1801 = vmatprep.subr.mxu0 0.0
      %v1802 = vand.u32 %v1196, 4294901760
      %1803 = vmatpush1.msra.mxu0 %v1802
      %1804 = vmatprep.subr.mxu0 0.0
      %v1805 = vand.u32 %v1195, 4294901760
      %1806 = vmatpush1.msra.mxu0 %v1805
      %1807 = vmatprep.subr.mxu0 0.0
      %v1808 = vand.u32 %v1194, 4294901760
      %1809 = vmatpush1.msra.mxu0 %v1808
      %1810 = vmatprep.subr.mxu0 0.0
      %v1811 = vand.u32 %v1193, 4294901760
      %1812 = vmatpush1.msra.mxu0 %v1811
      %1813 = vmatprep.subr.mxu0 0.0
      %v1814 = vand.u32 %v1192, 4294901760
      %1815 = vmatpush1.msra.mxu0 %v1814
      %1816 = vmatprep.subr.mxu0 0.0
      %v1817 = vand.u32 %v1191, 4294901760
      %1818 = vmatpush1.msra.mxu0 %v1817
      %1819 = vmatprep.subr.mxu0 0.0
      %v1820 = vand.u32 %v1190, 4294901760
      %1821 = vmatpush1.msra.mxu0 %v1820
      %1822 = vmatprep.subr.mxu0 0.0
      %v1823 = vand.u32 %v1189, 4294901760
      %1824 = vmatpush1.msra.mxu0 %v1823
      %1825 = vmatprep.subr.mxu0 0.0
      %v1826 = vand.u32 %v1188, 4294901760
      %1827 = vmatpush1.msra.mxu0 %v1826
      %1828 = vmatprep.subr.mxu0 0.0
      %v1829 = vand.u32 %v1187, 4294901760
      %1830 = vmatpush1.msra.mxu0 %v1829
      %1831 = vmatprep.subr.mxu0 0.0
      %v1832 = vand.u32 %v1186, 4294901760
      %1833 = vmatpush1.msra.mxu0 %v1832
      %1834 = vmatprep.subr.mxu0 0.0
      %v1835 = vand.u32 %v1185, 4294901760
      %1836 = vmatpush1.msra.mxu0 %v1835
      %1837 = vmatprep.subr.mxu0 0.0
      %1838 = vmatpush2.msra.mxu0 0.0
      %1839 = vmatprep.subr.mxu0 0.0
      %1840 = vmatpush2.msra.mxu0 0.0
      %1841 = vmatprep.subr.mxu0 0.0
      %1842 = vmatpush2.msra.mxu0 0.0
      %1843 = vmatprep.subr.mxu0 0.0
      %1844 = vmatpush2.msra.mxu0 0.0
      %1845 = vmatprep.subr.mxu0 0.0
      %1846 = vmatpush2.msra.mxu0 0.0
      %1847 = vmatprep.subr.mxu0 0.0
      %1848 = vmatpush2.msra.mxu0 0.0
      %1849 = vmatprep.subr.mxu0 0.0
      %1850 = vmatpush2.msra.mxu0 0.0
      %1851 = vmatprep.subr.mxu0 0.0
      %1852 = vmatpush2.msra.mxu0 0.0
      %1853 = vmatprep.subr.mxu0 0.0
      %1854 = vmatpush2.msra.mxu0 0.0
      %1855 = vmatprep.subr.mxu0 0.0
      %1856 = vmatpush2.msra.mxu0 0.0
      %1857 = vmatprep.subr.mxu0 0.0
      %1858 = vmatpush2.msra.mxu0 0.0
      %1859 = vmatprep.subr.mxu0 0.0
      %1860 = vmatpush2.msra.mxu0 0.0
      %1861 = vmatprep.subr.mxu0 0.0
      %1862 = vmatpush2.msra.mxu0 0.0
      %1863 = vmatprep.subr.mxu0 0.0
      %1864 = vmatpush2.msra.mxu0 0.0
      %1865 = vmatprep.subr.mxu0 0.0
      %1866 = vmatpush2.msra.mxu0 0.0
      %1867 = vmatprep.subr.mxu0 0.0
      %1868 = vmatpush2.msra.mxu0 0.0
      %1869 = vmatprep.mubr.f32.mxu0 0.0
      %v1870 = vand.u32 %v1205, 4294901760
      %1871 = vmatmul.mubr.f32.gmra.mxu0 %v1870
      %v1872 = vpop.f32.mrf.mxu0
      %v1873 = vadd.f32 %v1778, %v1872
      %v1874 = vpop.f32.mrf.mxu0
      %1875 = vmatprep.mubr.f32.mxu0 0.0
      %v1876 = vand.u32 %v1208, 4294901760
      %1877 = vmatmul.mubr.f32.gmra.mxu0 %v1876
      %v1878 = vpop.f32.mrf.mxu0
      %v1879 = vadd.f32 %v1784, %v1878
      %v1880 = vpop.f32.mrf.mxu0
      %1881 = vmatprep.mubr.f32.mxu0 0.0
      %v1882 = vand.u32 %v1211, 4294901760
      %1883 = vmatmul.mubr.f32.gmra.mxu0 %v1882
      %v1884 = vpop.f32.mrf.mxu0
      %v1885 = vadd.f32 %v1790, %v1884
      %v1886 = vpop.f32.mrf.mxu0
      %1887 = vdwg.mxu0
      %v1888 = vmul.f32 %v1873, %v363
      %v1889 = vmul.f32 %v1879, %v368
      %v1890 = vmul.f32 %v1885, %v373
      %v1891 = vmax.f32 %v1888, 0.0
      %v1892 = vmax.f32 %v1889, 0.0
      %v1893 = vmax.f32 %v1890, 0.0
      %v1894 = vrot.slane %v1891, 7
      %v1895 = vrot.slane %v1892, 7
      %v1896 = vrot.slane %v1893, 7
      %v1897 = vsel %vm378, %v1895, %v1896
      %v1898 = vsel %vm378, %v1894, %v1895
      %v1899 = vsel %vm378, %v1896, %v1894
      %v1900 = vmul.f32 %v1899, %v354
      %v1901 = vmul.f32 %v1898, %v355
      %v1902 = vmul.f32 %v1897, %v356
      %v1903 = vrot.slane %v1891, 1
      %v1904 = vrot.slane %v1892, 1
      %v1905 = vrot.slane %v1893, 1
      %v1906 = vsel %vm388, %v1904, %v1905
      %v1907 = vsel %vm388, %v1903, %v1904
      %v1908 = vsel %vm388, %v1905, %v1903
      %v1909 = vmul.f32 %v1907, %v357
      %v1910 = vmul.f32 %v1906, %v358
      %v1911 = vmul.f32 %v1908, %v359
      %1915 = vrot.lane.b32.xlu0 %v1891, 32
      %v1916 = vpop.permute.xlu0 %1915
      %1917 = vrot.lane.b32.xlu0 %v1892, 32
      %v1918 = vpop.permute.xlu0 %1917
      %1919 = vrot.lane.b32.xlu0 %v1893, 32
      %v1920 = vpop.permute.xlu0 %1919
      %1927 = vrot.lane.b32.xlu0 %v1909, 64
      %v1928 = vpop.permute.xlu0 %1927
      %1929 = vrot.lane.b32.xlu0 %v1910, 64
      %v1930 = vpop.permute.xlu0 %1929
      %1931 = vrot.lane.b32.xlu0 %v1911, 64
      %v1932 = vpop.permute.xlu0 %1931
      %v1936 = vsel %vm419, %v1900, %v1916
      %v1937 = vsel %vm419, %v1901, %v1918
      %v1938 = vsel %vm419, %v1902, %v1920
      %v1939 = vsel %vm423, %v1936, %v1928
      %v1940 = vsel %vm423, %v1937, %v1930
      %v1941 = vsel %vm423, %v1938, %v1932
      %v1942 = vld [vmem:[%s6] sm:$0xff]
      %v1943 = vld [vmem:[%s6 + $0x8] sm:$0xff]
      %v1944 = vld [vmem:[%s6 + $0x10] sm:$0xff]
      %v1945 = vld [vmem:[%s6 + $0x18] sm:$0xff]
      %v1946 = vld [vmem:[%s6 + $0x20] sm:$0xff]
      %v1947 = vld [vmem:[%s6 + $0x28] sm:$0xff]
      %v1948 = vld [vmem:[%s6 + $0x30] sm:$0xff]
      %v1949 = vld [vmem:[%s6 + $0x38] sm:$0xff]
      %v1950 = vld [vmem:[%s6 + $0x40] sm:$0xff]
      %v1951 = vld [vmem:[%s6 + $0x48] sm:$0xff]
      %v1952 = vld [vmem:[%s6 + $0x50] sm:$0xff]
      %v1953 = vld [vmem:[%s6 + $0x58] sm:$0xff]
      %v1954 = vld [vmem:[%s7] sm:$0x1]
      %v1956 = vlaneseq
      %v1957 = vshrl.u32 %v1956, 7
      %v1958 = vsub.s32 0, %v1957
      %v1959 = vrot.slane %v1954, %v1958
      %v1962 = vsel %vm446, %v1939, 0
      %v1965 = vsel %vm446, %v1940, 0
      %v1968 = vsel %vm446, %v1941, 0
      %1970 = vmatprep.subr.mxu0 0.0
      %1971 = vmatpush1.msra.mxu0 0.0
      %1972 = vmatprep.subr.mxu0 0.0
      %1973 = vmatpush1.msra.mxu0 0.0
      %1974 = vmatprep.subr.mxu0 0.0
      %1975 = vmatpush1.msra.mxu0 0.0
      %1976 = vmatprep.subr.mxu0 0.0
      %1977 = vmatpush1.msra.mxu0 0.0
      %1978 = vmatprep.subr.mxu0 0.0
      %v1979 = vand.u32 %v1953, 4294901760
      %1980 = vmatpush1.msra.mxu0 %v1979
      %1981 = vmatprep.subr.mxu0 0.0
      %v1982 = vand.u32 %v1952, 4294901760
      %1983 = vmatpush1.msra.mxu0 %v1982
      %1984 = vmatprep.subr.mxu0 0.0
      %v1985 = vand.u32 %v1951, 4294901760
      %1986 = vmatpush1.msra.mxu0 %v1985
      %1987 = vmatprep.subr.mxu0 0.0
      %v1988 = vand.u32 %v1950, 4294901760
      %1989 = vmatpush1.msra.mxu0 %v1988
      %1990 = vmatprep.subr.mxu0 0.0
      %v1991 = vand.u32 %v1949, 4294901760
      %1992 = vmatpush1.msra.mxu0 %v1991
      %1993 = vmatprep.subr.mxu0 0.0
      %v1994 = vand.u32 %v1948, 4294901760
      %1995 = vmatpush1.msra.mxu0 %v1994
      %1996 = vmatprep.subr.mxu0 0.0
      %v1997 = vand.u32 %v1947, 4294901760
      %1998 = vmatpush1.msra.mxu0 %v1997
      %1999 = vmatprep.subr.mxu0 0.0
      %v2000 = vand.u32 %v1946, 4294901760
      %2001 = vmatpush1.msra.mxu0 %v2000
      %2002 = vmatprep.subr.mxu0 0.0
      %v2003 = vand.u32 %v1945, 4294901760
      %2004 = vmatpush1.msra.mxu0 %v2003
      %2005 = vmatprep.subr.mxu0 0.0
      %v2006 = vand.u32 %v1944, 4294901760
      %2007 = vmatpush1.msra.mxu0 %v2006
      %2008 = vmatprep.subr.mxu0 0.0
      %v2009 = vand.u32 %v1943, 4294901760
      %2010 = vmatpush1.msra.mxu0 %v2009
      %2011 = vmatprep.subr.mxu0 0.0
      %v2012 = vand.u32 %v1942, 4294901760
      %2013 = vmatpush1.msra.mxu0 %v2012
      %2014 = vmatprep.subr.mxu0 0.0
      %2015 = vmatpush2.msra.mxu0 0.0
      %2016 = vmatprep.subr.mxu0 0.0
      %2017 = vmatpush2.msra.mxu0 0.0
      %2018 = vmatprep.subr.mxu0 0.0
      %2019 = vmatpush2.msra.mxu0 0.0
      %2020 = vmatprep.subr.mxu0 0.0
      %2021 = vmatpush2.msra.mxu0 0.0
      %2022 = vmatprep.subr.mxu0 0.0
      %2023 = vmatpush2.msra.mxu0 0.0
      %2024 = vmatprep.subr.mxu0 0.0
      %2025 = vmatpush2.msra.mxu0 0.0
      %2026 = vmatprep.subr.mxu0 0.0
      %2027 = vmatpush2.msra.mxu0 0.0
      %2028 = vmatprep.subr.mxu0 0.0
      %2029 = vmatpush2.msra.mxu0 0.0
      %2030 = vmatprep.subr.mxu0 0.0
      %2031 = vmatpush2.msra.mxu0 0.0
      %2032 = vmatprep.subr.mxu0 0.0
      %2033 = vmatpush2.msra.mxu0 0.0
      %2034 = vmatprep.subr.mxu0 0.0
      %2035 = vmatpush2.msra.mxu0 0.0
      %2036 = vmatprep.subr.mxu0 0.0
      %2037 = vmatpush2.msra.mxu0 0.0
      %2038 = vmatprep.subr.mxu0 0.0
      %2039 = vmatpush2.msra.mxu0 0.0
      %2040 = vmatprep.subr.mxu0 0.0
      %2041 = vmatpush2.msra.mxu0 0.0
      %2042 = vmatprep.subr.mxu0 0.0
      %2043 = vmatpush2.msra.mxu0 0.0
      %2044 = vmatprep.subr.mxu0 0.0
      %2045 = vmatpush2.msra.mxu0 0.0
      %2046 = vmatprep.mubr.f32.mxu0 0.0
      %v2047 = vand.u32 %v1962, 4294901760
      %v2048 = vsub.f32 %v1962, %v2047
      %v2049 = vand.u32 %v2048, 4294901760
      %v2050 = vsub.f32 %v2048, %v2049
      %v2051 = vand.u32 %v2050, 4294901760
      %2052 = vmatmul.mubr.f32.gmra.mxu0 %v2051
      %v2053 = vpop.f32.mrf.mxu0
      %v2054 = vadd.f32 %v1959, %v2053
      %v2055 = vpop.f32.mrf.mxu0
      %2056 = vmatprep.mubr.f32.mxu0 0.0
      %v2057 = vand.u32 %v1965, 4294901760
      %v2058 = vsub.f32 %v1965, %v2057
      %v2059 = vand.u32 %v2058, 4294901760
      %v2060 = vsub.f32 %v2058, %v2059
      %v2061 = vand.u32 %v2060, 4294901760
      %2062 = vmatmul.mubr.f32.gmra.mxu0 %v2061
      %v2063 = vpop.f32.mrf.mxu0
      %v2064 = vadd.f32 %v1959, %v2063
      %v2065 = vpop.f32.mrf.mxu0
      %2066 = vmatprep.mubr.f32.mxu0 0.0
      %v2067 = vand.u32 %v1968, 4294901760
      %v2068 = vsub.f32 %v1968, %v2067
      %v2069 = vand.u32 %v2068, 4294901760
      %v2070 = vsub.f32 %v2068, %v2069
      %v2071 = vand.u32 %v2070, 4294901760
      %2072 = vmatmul.mubr.f32.gmra.mxu0 %v2071
      %v2073 = vpop.f32.mrf.mxu0
      %v2074 = vadd.f32 %v1959, %v2073
      %v2075 = vpop.f32.mrf.mxu0
      %2076 = vdwg.mxu0
      %2077 = vmatprep.subr.mxu0 0.0
      %2078 = vmatpush1.msra.mxu0 0.0
      %2079 = vmatprep.subr.mxu0 0.0
      %2080 = vmatpush1.msra.mxu0 0.0
      %2081 = vmatprep.subr.mxu0 0.0
      %2082 = vmatpush1.msra.mxu0 0.0
      %2083 = vmatprep.subr.mxu0 0.0
      %2084 = vmatpush1.msra.mxu0 0.0
      %2085 = vmatprep.subr.mxu0 0.0
      %v2086 = vand.u32 %v1953, 4294901760
      %v2087 = vsub.f32 %v1953, %v2086
      %v2088 = vand.u32 %v2087, 4294901760
      %v2089 = vsub.f32 %v2087, %v2088
      %v2090 = vand.u32 %v2089, 4294901760
      %2091 = vmatpush1.msra.mxu0 %v2090
      %2092 = vmatprep.subr.mxu0 0.0
      %v2093 = vand.u32 %v1952, 4294901760
      %v2094 = vsub.f32 %v1952, %v2093
      %v2095 = vand.u32 %v2094, 4294901760
      %v2096 = vsub.f32 %v2094, %v2095
      %v2097 = vand.u32 %v2096, 4294901760
      %2098 = vmatpush1.msra.mxu0 %v2097
      %2099 = vmatprep.subr.mxu0 0.0
      %v2100 = vand.u32 %v1951, 4294901760
      %v2101 = vsub.f32 %v1951, %v2100
      %v2102 = vand.u32 %v2101, 4294901760
      %v2103 = vsub.f32 %v2101, %v2102
      %v2104 = vand.u32 %v2103, 4294901760
      %2105 = vmatpush1.msra.mxu0 %v2104
      %2106 = vmatprep.subr.mxu0 0.0
      %v2107 = vand.u32 %v1950, 4294901760
      %v2108 = vsub.f32 %v1950, %v2107
      %v2109 = vand.u32 %v2108, 4294901760
      %v2110 = vsub.f32 %v2108, %v2109
      %v2111 = vand.u32 %v2110, 4294901760
      %2112 = vmatpush1.msra.mxu0 %v2111
      %2113 = vmatprep.subr.mxu0 0.0
      %v2114 = vand.u32 %v1949, 4294901760
      %v2115 = vsub.f32 %v1949, %v2114
      %v2116 = vand.u32 %v2115, 4294901760
      %v2117 = vsub.f32 %v2115, %v2116
      %v2118 = vand.u32 %v2117, 4294901760
      %2119 = vmatpush1.msra.mxu0 %v2118
      %2120 = vmatprep.subr.mxu0 0.0
      %v2121 = vand.u32 %v1948, 4294901760
      %v2122 = vsub.f32 %v1948, %v2121
      %v2123 = vand.u32 %v2122, 4294901760
      %v2124 = vsub.f32 %v2122, %v2123
      %v2125 = vand.u32 %v2124, 4294901760
      %2126 = vmatpush1.msra.mxu0 %v2125
      %2127 = vmatprep.subr.mxu0 0.0
      %v2128 = vand.u32 %v1947, 4294901760
      %v2129 = vsub.f32 %v1947, %v2128
      %v2130 = vand.u32 %v2129, 4294901760
      %v2131 = vsub.f32 %v2129, %v2130
      %v2132 = vand.u32 %v2131, 4294901760
      %2133 = vmatpush1.msra.mxu0 %v2132
      %2134 = vmatprep.subr.mxu0 0.0
      %v2135 = vand.u32 %v1946, 4294901760
      %v2136 = vsub.f32 %v1946, %v2135
      %v2137 = vand.u32 %v2136, 4294901760
      %v2138 = vsub.f32 %v2136, %v2137
      %v2139 = vand.u32 %v2138, 4294901760
      %2140 = vmatpush1.msra.mxu0 %v2139
      %2141 = vmatprep.subr.mxu0 0.0
      %v2142 = vand.u32 %v1945, 4294901760
      %v2143 = vsub.f32 %v1945, %v2142
      %v2144 = vand.u32 %v2143, 4294901760
      %v2145 = vsub.f32 %v2143, %v2144
      %v2146 = vand.u32 %v2145, 4294901760
      %2147 = vmatpush1.msra.mxu0 %v2146
      %2148 = vmatprep.subr.mxu0 0.0
      %v2149 = vand.u32 %v1944, 4294901760
      %v2150 = vsub.f32 %v1944, %v2149
      %v2151 = vand.u32 %v2150, 4294901760
      %v2152 = vsub.f32 %v2150, %v2151
      %v2153 = vand.u32 %v2152, 4294901760
      %2154 = vmatpush1.msra.mxu0 %v2153
      %2155 = vmatprep.subr.mxu0 0.0
      %v2156 = vand.u32 %v1943, 4294901760
      %v2157 = vsub.f32 %v1943, %v2156
      %v2158 = vand.u32 %v2157, 4294901760
      %v2159 = vsub.f32 %v2157, %v2158
      %v2160 = vand.u32 %v2159, 4294901760
      %2161 = vmatpush1.msra.mxu0 %v2160
      %2162 = vmatprep.subr.mxu0 0.0
      %v2163 = vand.u32 %v1942, 4294901760
      %v2164 = vsub.f32 %v1942, %v2163
      %v2165 = vand.u32 %v2164, 4294901760
      %v2166 = vsub.f32 %v2164, %v2165
      %v2167 = vand.u32 %v2166, 4294901760
      %2168 = vmatpush1.msra.mxu0 %v2167
      %2169 = vmatprep.subr.mxu0 0.0
      %2170 = vmatpush2.msra.mxu0 0.0
      %2171 = vmatprep.subr.mxu0 0.0
      %2172 = vmatpush2.msra.mxu0 0.0
      %2173 = vmatprep.subr.mxu0 0.0
      %2174 = vmatpush2.msra.mxu0 0.0
      %2175 = vmatprep.subr.mxu0 0.0
      %2176 = vmatpush2.msra.mxu0 0.0
      %2177 = vmatprep.subr.mxu0 0.0
      %2178 = vmatpush2.msra.mxu0 0.0
      %2179 = vmatprep.subr.mxu0 0.0
      %2180 = vmatpush2.msra.mxu0 0.0
      %2181 = vmatprep.subr.mxu0 0.0
      %2182 = vmatpush2.msra.mxu0 0.0
      %2183 = vmatprep.subr.mxu0 0.0
      %2184 = vmatpush2.msra.mxu0 0.0
      %2185 = vmatprep.subr.mxu0 0.0
      %2186 = vmatpush2.msra.mxu0 0.0
      %2187 = vmatprep.subr.mxu0 0.0
      %2188 = vmatpush2.msra.mxu0 0.0
      %2189 = vmatprep.subr.mxu0 0.0
      %2190 = vmatpush2.msra.mxu0 0.0
      %2191 = vmatprep.subr.mxu0 0.0
      %2192 = vmatpush2.msra.mxu0 0.0
      %2193 = vmatprep.subr.mxu0 0.0
      %2194 = vmatpush2.msra.mxu0 0.0
      %2195 = vmatprep.subr.mxu0 0.0
      %2196 = vmatpush2.msra.mxu0 0.0
      %2197 = vmatprep.subr.mxu0 0.0
      %2198 = vmatpush2.msra.mxu0 0.0
      %2199 = vmatprep.subr.mxu0 0.0
      %2200 = vmatpush2.msra.mxu0 0.0
      %2201 = vmatprep.mubr.f32.mxu0 0.0
      %v2202 = vand.u32 %v1962, 4294901760
      %2203 = vmatmul.mubr.f32.gmra.mxu0 %v2202
      %v2204 = vpop.f32.mrf.mxu0
      %v2205 = vadd.f32 %v2054, %v2204
      %v2206 = vpop.f32.mrf.mxu0
      %2207 = vmatprep.mubr.f32.mxu0 0.0
      %v2208 = vand.u32 %v1965, 4294901760
      %2209 = vmatmul.mubr.f32.gmra.mxu0 %v2208
      %v2210 = vpop.f32.mrf.mxu0
      %v2211 = vadd.f32 %v2064, %v2210
      %v2212 = vpop.f32.mrf.mxu0
      %2213 = vmatprep.mubr.f32.mxu0 0.0
      %v2214 = vand.u32 %v1968, 4294901760
      %2215 = vmatmul.mubr.f32.gmra.mxu0 %v2214
      %v2216 = vpop.f32.mrf.mxu0
      %v2217 = vadd.f32 %v2074, %v2216
      %v2218 = vpop.f32.mrf.mxu0
      %2219 = vdwg.mxu0
      %2220 = vmatprep.subr.mxu0 0.0
      %2221 = vmatpush1.msra.mxu0 0.0
      %2222 = vmatprep.subr.mxu0 0.0
      %2223 = vmatpush1.msra.mxu0 0.0
      %2224 = vmatprep.subr.mxu0 0.0
      %2225 = vmatpush1.msra.mxu0 0.0
      %2226 = vmatprep.subr.mxu0 0.0
      %2227 = vmatpush1.msra.mxu0 0.0
      %2228 = vmatprep.subr.mxu0 0.0
      %v2229 = vand.u32 %v1953, 4294901760
      %v2230 = vsub.f32 %v1953, %v2229
      %2231 = vmatpush1.msra.mxu0 %v2230
      %2232 = vmatprep.subr.mxu0 0.0
      %v2233 = vand.u32 %v1952, 4294901760
      %v2234 = vsub.f32 %v1952, %v2233
      %2235 = vmatpush1.msra.mxu0 %v2234
      %2236 = vmatprep.subr.mxu0 0.0
      %v2237 = vand.u32 %v1951, 4294901760
      %v2238 = vsub.f32 %v1951, %v2237
      %2239 = vmatpush1.msra.mxu0 %v2238
      %2240 = vmatprep.subr.mxu0 0.0
      %v2241 = vand.u32 %v1950, 4294901760
      %v2242 = vsub.f32 %v1950, %v2241
      %2243 = vmatpush1.msra.mxu0 %v2242
      %2244 = vmatprep.subr.mxu0 0.0
      %v2245 = vand.u32 %v1949, 4294901760
      %v2246 = vsub.f32 %v1949, %v2245
      %2247 = vmatpush1.msra.mxu0 %v2246
      %2248 = vmatprep.subr.mxu0 0.0
      %v2249 = vand.u32 %v1948, 4294901760
      %v2250 = vsub.f32 %v1948, %v2249
      %2251 = vmatpush1.msra.mxu0 %v2250
      %2252 = vmatprep.subr.mxu0 0.0
      %v2253 = vand.u32 %v1947, 4294901760
      %v2254 = vsub.f32 %v1947, %v2253
      %2255 = vmatpush1.msra.mxu0 %v2254
      %2256 = vmatprep.subr.mxu0 0.0
      %v2257 = vand.u32 %v1946, 4294901760
      %v2258 = vsub.f32 %v1946, %v2257
      %2259 = vmatpush1.msra.mxu0 %v2258
      %2260 = vmatprep.subr.mxu0 0.0
      %v2261 = vand.u32 %v1945, 4294901760
      %v2262 = vsub.f32 %v1945, %v2261
      %2263 = vmatpush1.msra.mxu0 %v2262
      %2264 = vmatprep.subr.mxu0 0.0
      %v2265 = vand.u32 %v1944, 4294901760
      %v2266 = vsub.f32 %v1944, %v2265
      %2267 = vmatpush1.msra.mxu0 %v2266
      %2268 = vmatprep.subr.mxu0 0.0
      %v2269 = vand.u32 %v1943, 4294901760
      %v2270 = vsub.f32 %v1943, %v2269
      %2271 = vmatpush1.msra.mxu0 %v2270
      %2272 = vmatprep.subr.mxu0 0.0
      %v2273 = vand.u32 %v1942, 4294901760
      %v2274 = vsub.f32 %v1942, %v2273
      %2275 = vmatpush1.msra.mxu0 %v2274
      %2276 = vmatprep.subr.mxu0 0.0
      %2277 = vmatpush2.msra.mxu0 0.0
      %2278 = vmatprep.subr.mxu0 0.0
      %2279 = vmatpush2.msra.mxu0 0.0
      %2280 = vmatprep.subr.mxu0 0.0
      %2281 = vmatpush2.msra.mxu0 0.0
      %2282 = vmatprep.subr.mxu0 0.0
      %2283 = vmatpush2.msra.mxu0 0.0
      %2284 = vmatprep.subr.mxu0 0.0
      %2285 = vmatpush2.msra.mxu0 0.0
      %2286 = vmatprep.subr.mxu0 0.0
      %2287 = vmatpush2.msra.mxu0 0.0
      %2288 = vmatprep.subr.mxu0 0.0
      %2289 = vmatpush2.msra.mxu0 0.0
      %2290 = vmatprep.subr.mxu0 0.0
      %2291 = vmatpush2.msra.mxu0 0.0
      %2292 = vmatprep.subr.mxu0 0.0
      %2293 = vmatpush2.msra.mxu0 0.0
      %2294 = vmatprep.subr.mxu0 0.0
      %2295 = vmatpush2.msra.mxu0 0.0
      %2296 = vmatprep.subr.mxu0 0.0
      %2297 = vmatpush2.msra.mxu0 0.0
      %2298 = vmatprep.subr.mxu0 0.0
      %2299 = vmatpush2.msra.mxu0 0.0
      %2300 = vmatprep.subr.mxu0 0.0
      %2301 = vmatpush2.msra.mxu0 0.0
      %2302 = vmatprep.subr.mxu0 0.0
      %2303 = vmatpush2.msra.mxu0 0.0
      %2304 = vmatprep.subr.mxu0 0.0
      %2305 = vmatpush2.msra.mxu0 0.0
      %2306 = vmatprep.subr.mxu0 0.0
      %2307 = vmatpush2.msra.mxu0 0.0
      %2308 = vmatprep.mubr.f32.mxu0 0.0
      %v2309 = vand.u32 %v1962, 4294901760
      %v2310 = vsub.f32 %v1962, %v2309
      %2311 = vmatmul.mubr.f32.gmra.mxu0 %v2310
      %v2312 = vpop.f32.mrf.mxu0
      %v2313 = vadd.f32 %v2205, %v2312
      %v2314 = vpop.f32.mrf.mxu0
      %2315 = vmatprep.mubr.f32.mxu0 0.0
      %v2316 = vand.u32 %v1965, 4294901760
      %v2317 = vsub.f32 %v1965, %v2316
      %2318 = vmatmul.mubr.f32.gmra.mxu0 %v2317
      %v2319 = vpop.f32.mrf.mxu0
      %v2320 = vadd.f32 %v2211, %v2319
      %v2321 = vpop.f32.mrf.mxu0
      %2322 = vmatprep.mubr.f32.mxu0 0.0
      %v2323 = vand.u32 %v1968, 4294901760
      %v2324 = vsub.f32 %v1968, %v2323
      %2325 = vmatmul.mubr.f32.gmra.mxu0 %v2324
      %v2326 = vpop.f32.mrf.mxu0
      %v2327 = vadd.f32 %v2217, %v2326
      %v2328 = vpop.f32.mrf.mxu0
      %2329 = vdwg.mxu0
      %2330 = vmatprep.subr.mxu0 0.0
      %2331 = vmatpush1.msra.mxu0 0.0
      %2332 = vmatprep.subr.mxu0 0.0
      %2333 = vmatpush1.msra.mxu0 0.0
      %2334 = vmatprep.subr.mxu0 0.0
      %2335 = vmatpush1.msra.mxu0 0.0
      %2336 = vmatprep.subr.mxu0 0.0
      %2337 = vmatpush1.msra.mxu0 0.0
      %2338 = vmatprep.subr.mxu0 0.0
      %v2339 = vand.u32 %v1953, 4294901760
      %2340 = vmatpush1.msra.mxu0 %v2339
      %2341 = vmatprep.subr.mxu0 0.0
      %v2342 = vand.u32 %v1952, 4294901760
      %2343 = vmatpush1.msra.mxu0 %v2342
      %2344 = vmatprep.subr.mxu0 0.0
      %v2345 = vand.u32 %v1951, 4294901760
      %2346 = vmatpush1.msra.mxu0 %v2345
      %2347 = vmatprep.subr.mxu0 0.0
      %v2348 = vand.u32 %v1950, 4294901760
      %2349 = vmatpush1.msra.mxu0 %v2348
      %2350 = vmatprep.subr.mxu0 0.0
      %v2351 = vand.u32 %v1949, 4294901760
      %2352 = vmatpush1.msra.mxu0 %v2351
      %2353 = vmatprep.subr.mxu0 0.0
      %v2354 = vand.u32 %v1948, 4294901760
      %2355 = vmatpush1.msra.mxu0 %v2354
      %2356 = vmatprep.subr.mxu0 0.0
      %v2357 = vand.u32 %v1947, 4294901760
      %2358 = vmatpush1.msra.mxu0 %v2357
      %2359 = vmatprep.subr.mxu0 0.0
      %v2360 = vand.u32 %v1946, 4294901760
      %2361 = vmatpush1.msra.mxu0 %v2360
      %2362 = vmatprep.subr.mxu0 0.0
      %v2363 = vand.u32 %v1945, 4294901760
      %2364 = vmatpush1.msra.mxu0 %v2363
      %2365 = vmatprep.subr.mxu0 0.0
      %v2366 = vand.u32 %v1944, 4294901760
      %2367 = vmatpush1.msra.mxu0 %v2366
      %2368 = vmatprep.subr.mxu0 0.0
      %v2369 = vand.u32 %v1943, 4294901760
      %2370 = vmatpush1.msra.mxu0 %v2369
      %2371 = vmatprep.subr.mxu0 0.0
      %v2372 = vand.u32 %v1942, 4294901760
      %2373 = vmatpush1.msra.mxu0 %v2372
      %2374 = vmatprep.subr.mxu0 0.0
      %2375 = vmatpush2.msra.mxu0 0.0
      %2376 = vmatprep.subr.mxu0 0.0
      %2377 = vmatpush2.msra.mxu0 0.0
      %2378 = vmatprep.subr.mxu0 0.0
      %2379 = vmatpush2.msra.mxu0 0.0
      %2380 = vmatprep.subr.mxu0 0.0
      %2381 = vmatpush2.msra.mxu0 0.0
      %2382 = vmatprep.subr.mxu0 0.0
      %2383 = vmatpush2.msra.mxu0 0.0
      %2384 = vmatprep.subr.mxu0 0.0
      %2385 = vmatpush2.msra.mxu0 0.0
      %2386 = vmatprep.subr.mxu0 0.0
      %2387 = vmatpush2.msra.mxu0 0.0
      %2388 = vmatprep.subr.mxu0 0.0
      %2389 = vmatpush2.msra.mxu0 0.0
      %2390 = vmatprep.subr.mxu0 0.0
      %2391 = vmatpush2.msra.mxu0 0.0
      %2392 = vmatprep.subr.mxu0 0.0
      %2393 = vmatpush2.msra.mxu0 0.0
      %2394 = vmatprep.subr.mxu0 0.0
      %2395 = vmatpush2.msra.mxu0 0.0
      %2396 = vmatprep.subr.mxu0 0.0
      %2397 = vmatpush2.msra.mxu0 0.0
      %2398 = vmatprep.subr.mxu0 0.0
      %2399 = vmatpush2.msra.mxu0 0.0
      %2400 = vmatprep.subr.mxu0 0.0
      %2401 = vmatpush2.msra.mxu0 0.0
      %2402 = vmatprep.subr.mxu0 0.0
      %2403 = vmatpush2.msra.mxu0 0.0
      %2404 = vmatprep.subr.mxu0 0.0
      %2405 = vmatpush2.msra.mxu0 0.0
      %2406 = vmatprep.mubr.f32.mxu0 0.0
      %v2407 = vand.u32 %v1962, 4294901760
      %v2408 = vsub.f32 %v1962, %v2407
      %v2409 = vand.u32 %v2408, 4294901760
      %2410 = vmatmul.mubr.f32.gmra.mxu0 %v2409
      %v2411 = vpop.f32.mrf.mxu0
      %v2412 = vadd.f32 %v2313, %v2411
      %v2413 = vpop.f32.mrf.mxu0
      %2414 = vmatprep.mubr.f32.mxu0 0.0
      %v2415 = vand.u32 %v1965, 4294901760
      %v2416 = vsub.f32 %v1965, %v2415
      %v2417 = vand.u32 %v2416, 4294901760
      %2418 = vmatmul.mubr.f32.gmra.mxu0 %v2417
      %v2419 = vpop.f32.mrf.mxu0
      %v2420 = vadd.f32 %v2320, %v2419
      %v2421 = vpop.f32.mrf.mxu0
      %2422 = vmatprep.mubr.f32.mxu0 0.0
      %v2423 = vand.u32 %v1968, 4294901760
      %v2424 = vsub.f32 %v1968, %v2423
      %v2425 = vand.u32 %v2424, 4294901760
      %2426 = vmatmul.mubr.f32.gmra.mxu0 %v2425
      %v2427 = vpop.f32.mrf.mxu0
      %v2428 = vadd.f32 %v2327, %v2427
      %v2429 = vpop.f32.mrf.mxu0
      %2430 = vdwg.mxu0
      %2431 = vmatprep.subr.mxu0 0.0
      %2432 = vmatpush1.msra.mxu0 0.0
      %2433 = vmatprep.subr.mxu0 0.0
      %2434 = vmatpush1.msra.mxu0 0.0
      %2435 = vmatprep.subr.mxu0 0.0
      %2436 = vmatpush1.msra.mxu0 0.0
      %2437 = vmatprep.subr.mxu0 0.0
      %2438 = vmatpush1.msra.mxu0 0.0
      %2439 = vmatprep.subr.mxu0 0.0
      %v2440 = vand.u32 %v1953, 4294901760
      %v2441 = vsub.f32 %v1953, %v2440
      %v2442 = vand.u32 %v2441, 4294901760
      %2443 = vmatpush1.msra.mxu0 %v2442
      %2444 = vmatprep.subr.mxu0 0.0
      %v2445 = vand.u32 %v1952, 4294901760
      %v2446 = vsub.f32 %v1952, %v2445
      %v2447 = vand.u32 %v2446, 4294901760
      %2448 = vmatpush1.msra.mxu0 %v2447
      %2449 = vmatprep.subr.mxu0 0.0
      %v2450 = vand.u32 %v1951, 4294901760
      %v2451 = vsub.f32 %v1951, %v2450
      %v2452 = vand.u32 %v2451, 4294901760
      %2453 = vmatpush1.msra.mxu0 %v2452
      %2454 = vmatprep.subr.mxu0 0.0
      %v2455 = vand.u32 %v1950, 4294901760
      %v2456 = vsub.f32 %v1950, %v2455
      %v2457 = vand.u32 %v2456, 4294901760
      %2458 = vmatpush1.msra.mxu0 %v2457
      %2459 = vmatprep.subr.mxu0 0.0
      %v2460 = vand.u32 %v1949, 4294901760
      %v2461 = vsub.f32 %v1949, %v2460
      %v2462 = vand.u32 %v2461, 4294901760
      %2463 = vmatpush1.msra.mxu0 %v2462
      %2464 = vmatprep.subr.mxu0 0.0
      %v2465 = vand.u32 %v1948, 4294901760
      %v2466 = vsub.f32 %v1948, %v2465
      %v2467 = vand.u32 %v2466, 4294901760
      %2468 = vmatpush1.msra.mxu0 %v2467
      %2469 = vmatprep.subr.mxu0 0.0
      %v2470 = vand.u32 %v1947, 4294901760
      %v2471 = vsub.f32 %v1947, %v2470
      %v2472 = vand.u32 %v2471, 4294901760
      %2473 = vmatpush1.msra.mxu0 %v2472
      %2474 = vmatprep.subr.mxu0 0.0
      %v2475 = vand.u32 %v1946, 4294901760
      %v2476 = vsub.f32 %v1946, %v2475
      %v2477 = vand.u32 %v2476, 4294901760
      %2478 = vmatpush1.msra.mxu0 %v2477
      %2479 = vmatprep.subr.mxu0 0.0
      %v2480 = vand.u32 %v1945, 4294901760
      %v2481 = vsub.f32 %v1945, %v2480
      %v2482 = vand.u32 %v2481, 4294901760
      %2483 = vmatpush1.msra.mxu0 %v2482
      %2484 = vmatprep.subr.mxu0 0.0
      %v2485 = vand.u32 %v1944, 4294901760
      %v2486 = vsub.f32 %v1944, %v2485
      %v2487 = vand.u32 %v2486, 4294901760
      %2488 = vmatpush1.msra.mxu0 %v2487
      %2489 = vmatprep.subr.mxu0 0.0
      %v2490 = vand.u32 %v1943, 4294901760
      %v2491 = vsub.f32 %v1943, %v2490
      %v2492 = vand.u32 %v2491, 4294901760
      %2493 = vmatpush1.msra.mxu0 %v2492
      %2494 = vmatprep.subr.mxu0 0.0
      %v2495 = vand.u32 %v1942, 4294901760
      %v2496 = vsub.f32 %v1942, %v2495
      %v2497 = vand.u32 %v2496, 4294901760
      %2498 = vmatpush1.msra.mxu0 %v2497
      %2499 = vmatprep.subr.mxu0 0.0
      %2500 = vmatpush2.msra.mxu0 0.0
      %2501 = vmatprep.subr.mxu0 0.0
      %2502 = vmatpush2.msra.mxu0 0.0
      %2503 = vmatprep.subr.mxu0 0.0
      %2504 = vmatpush2.msra.mxu0 0.0
      %2505 = vmatprep.subr.mxu0 0.0
      %2506 = vmatpush2.msra.mxu0 0.0
      %2507 = vmatprep.subr.mxu0 0.0
      %2508 = vmatpush2.msra.mxu0 0.0
      %2509 = vmatprep.subr.mxu0 0.0
      %2510 = vmatpush2.msra.mxu0 0.0
      %2511 = vmatprep.subr.mxu0 0.0
      %2512 = vmatpush2.msra.mxu0 0.0
      %2513 = vmatprep.subr.mxu0 0.0
      %2514 = vmatpush2.msra.mxu0 0.0
      %2515 = vmatprep.subr.mxu0 0.0
      %2516 = vmatpush2.msra.mxu0 0.0
      %2517 = vmatprep.subr.mxu0 0.0
      %2518 = vmatpush2.msra.mxu0 0.0
      %2519 = vmatprep.subr.mxu0 0.0
      %2520 = vmatpush2.msra.mxu0 0.0
      %2521 = vmatprep.subr.mxu0 0.0
      %2522 = vmatpush2.msra.mxu0 0.0
      %2523 = vmatprep.subr.mxu0 0.0
      %2524 = vmatpush2.msra.mxu0 0.0
      %2525 = vmatprep.subr.mxu0 0.0
      %2526 = vmatpush2.msra.mxu0 0.0
      %2527 = vmatprep.subr.mxu0 0.0
      %2528 = vmatpush2.msra.mxu0 0.0
      %2529 = vmatprep.subr.mxu0 0.0
      %2530 = vmatpush2.msra.mxu0 0.0
      %2531 = vmatprep.mubr.f32.mxu0 0.0
      %v2532 = vand.u32 %v1962, 4294901760
      %2533 = vmatmul.mubr.f32.gmra.mxu0 %v2532
      %v2534 = vpop.f32.mrf.mxu0
      %v2535 = vadd.f32 %v2412, %v2534
      %v2536 = vpop.f32.mrf.mxu0
      %2537 = vmatprep.mubr.f32.mxu0 0.0
      %v2538 = vand.u32 %v1965, 4294901760
      %2539 = vmatmul.mubr.f32.gmra.mxu0 %v2538
      %v2540 = vpop.f32.mrf.mxu0
      %v2541 = vadd.f32 %v2420, %v2540
      %v2542 = vpop.f32.mrf.mxu0
      %2543 = vmatprep.mubr.f32.mxu0 0.0
      %v2544 = vand.u32 %v1968, 4294901760
      %2545 = vmatmul.mubr.f32.gmra.mxu0 %v2544
      %v2546 = vpop.f32.mrf.mxu0
      %v2547 = vadd.f32 %v2428, %v2546
      %v2548 = vpop.f32.mrf.mxu0
      %2549 = vdwg.mxu0
      %2550 = vmatprep.subr.mxu0 0.0
      %2551 = vmatpush1.msra.mxu0 0.0
      %2552 = vmatprep.subr.mxu0 0.0
      %2553 = vmatpush1.msra.mxu0 0.0
      %2554 = vmatprep.subr.mxu0 0.0
      %2555 = vmatpush1.msra.mxu0 0.0
      %2556 = vmatprep.subr.mxu0 0.0
      %2557 = vmatpush1.msra.mxu0 0.0
      %2558 = vmatprep.subr.mxu0 0.0
      %v2559 = vand.u32 %v1953, 4294901760
      %2560 = vmatpush1.msra.mxu0 %v2559
      %2561 = vmatprep.subr.mxu0 0.0
      %v2562 = vand.u32 %v1952, 4294901760
      %2563 = vmatpush1.msra.mxu0 %v2562
      %2564 = vmatprep.subr.mxu0 0.0
      %v2565 = vand.u32 %v1951, 4294901760
      %2566 = vmatpush1.msra.mxu0 %v2565
      %2567 = vmatprep.subr.mxu0 0.0
      %v2568 = vand.u32 %v1950, 4294901760
      %2569 = vmatpush1.msra.mxu0 %v2568
      %2570 = vmatprep.subr.mxu0 0.0
      %v2571 = vand.u32 %v1949, 4294901760
      %2572 = vmatpush1.msra.mxu0 %v2571
      %2573 = vmatprep.subr.mxu0 0.0
      %v2574 = vand.u32 %v1948, 4294901760
      %2575 = vmatpush1.msra.mxu0 %v2574
      %2576 = vmatprep.subr.mxu0 0.0
      %v2577 = vand.u32 %v1947, 4294901760
      %2578 = vmatpush1.msra.mxu0 %v2577
      %2579 = vmatprep.subr.mxu0 0.0
      %v2580 = vand.u32 %v1946, 4294901760
      %2581 = vmatpush1.msra.mxu0 %v2580
      %2582 = vmatprep.subr.mxu0 0.0
      %v2583 = vand.u32 %v1945, 4294901760
      %2584 = vmatpush1.msra.mxu0 %v2583
      %2585 = vmatprep.subr.mxu0 0.0
      %v2586 = vand.u32 %v1944, 4294901760
      %2587 = vmatpush1.msra.mxu0 %v2586
      %2588 = vmatprep.subr.mxu0 0.0
      %v2589 = vand.u32 %v1943, 4294901760
      %2590 = vmatpush1.msra.mxu0 %v2589
      %2591 = vmatprep.subr.mxu0 0.0
      %v2592 = vand.u32 %v1942, 4294901760
      %2593 = vmatpush1.msra.mxu0 %v2592
      %2594 = vmatprep.subr.mxu0 0.0
      %2595 = vmatpush2.msra.mxu0 0.0
      %2596 = vmatprep.subr.mxu0 0.0
      %2597 = vmatpush2.msra.mxu0 0.0
      %2598 = vmatprep.subr.mxu0 0.0
      %2599 = vmatpush2.msra.mxu0 0.0
      %2600 = vmatprep.subr.mxu0 0.0
      %2601 = vmatpush2.msra.mxu0 0.0
      %2602 = vmatprep.subr.mxu0 0.0
      %2603 = vmatpush2.msra.mxu0 0.0
      %2604 = vmatprep.subr.mxu0 0.0
      %2605 = vmatpush2.msra.mxu0 0.0
      %2606 = vmatprep.subr.mxu0 0.0
      %2607 = vmatpush2.msra.mxu0 0.0
      %2608 = vmatprep.subr.mxu0 0.0
      %2609 = vmatpush2.msra.mxu0 0.0
      %2610 = vmatprep.subr.mxu0 0.0
      %2611 = vmatpush2.msra.mxu0 0.0
      %2612 = vmatprep.subr.mxu0 0.0
      %2613 = vmatpush2.msra.mxu0 0.0
      %2614 = vmatprep.subr.mxu0 0.0
      %2615 = vmatpush2.msra.mxu0 0.0
      %2616 = vmatprep.subr.mxu0 0.0
      %2617 = vmatpush2.msra.mxu0 0.0
      %2618 = vmatprep.subr.mxu0 0.0
      %2619 = vmatpush2.msra.mxu0 0.0
      %2620 = vmatprep.subr.mxu0 0.0
      %2621 = vmatpush2.msra.mxu0 0.0
      %2622 = vmatprep.subr.mxu0 0.0
      %2623 = vmatpush2.msra.mxu0 0.0
      %2624 = vmatprep.subr.mxu0 0.0
      %2625 = vmatpush2.msra.mxu0 0.0
      %2626 = vmatprep.mubr.f32.mxu0 0.0
      %v2627 = vand.u32 %v1962, 4294901760
      %2628 = vmatmul.mubr.f32.gmra.mxu0 %v2627
      %v2629 = vpop.f32.mrf.mxu0
      %v2630 = vadd.f32 %v2535, %v2629
      %v2631 = vpop.f32.mrf.mxu0
      %2632 = vmatprep.mubr.f32.mxu0 0.0
      %v2633 = vand.u32 %v1965, 4294901760
      %2634 = vmatmul.mubr.f32.gmra.mxu0 %v2633
      %v2635 = vpop.f32.mrf.mxu0
      %v2636 = vadd.f32 %v2541, %v2635
      %v2637 = vpop.f32.mrf.mxu0
      %2638 = vmatprep.mubr.f32.mxu0 0.0
      %v2639 = vand.u32 %v1968, 4294901760
      %2640 = vmatmul.mubr.f32.gmra.mxu0 %v2639
      %v2641 = vpop.f32.mrf.mxu0
      %v2642 = vadd.f32 %v2547, %v2641
      %v2643 = vpop.f32.mrf.mxu0
      %2644 = vdwg.mxu0
      %v2645 = vmul.f32 %v2630, %v363
      %v2646 = vmul.f32 %v2636, %v368
      %v2647 = vmul.f32 %v2642, %v373
      %v2648 = vxor.u32 %v2645, 2147483648
      %v2649 = vxor.u32 %v2646, 2147483648
      %v2650 = vxor.u32 %v2647, 2147483648
      %v2651 = vmul.f32 %v2648, 1.442695
      %v2652 = vpow.pop %v2651
      %v2653 = vmul.f32 %v2649, 1.442695
      %v2654 = vpow.pop %v2653
      %v2655 = vmul.f32 %v2650, 1.442695
      %v2656 = vpow.pop %v2655
      %v2657 = vadd.f32 %v2652, 1.0
      %v2658 = vadd.f32 %v2654, 1.0
      %v2659 = vadd.f32 %v2656, 1.0
      %v2660 = vrcp.pop %v2657
      %v2661 = vmul.f32 1.0, %v2660
      %v2662 = vrcp.pop %v2658
      %v2663 = vmul.f32 1.0, %v2662
      %v2664 = vrcp.pop %v2659
      %v2665 = vmul.f32 1.0, %v2664
      %v2666 = vlaneseq
      %v2667 = vand.u32 %v2666, 127
      %vm2668 = vcmp.eq.s32.totalorder %v2667, 7
      %v2669 = vsub.f32 1.0, %v2661
      %v2670 = vsub.f32 1.0, %v2663
      %v2671 = vsub.f32 1.0, %v2665
      %2673 = vset.pattern.permute.xlu0 7
      %2674 = vperm.xlu0 %2673, %v2669
      %v2675 = vpop.permute.xlu0 %2674
      %2678 = vset.pattern.permute.xlu0 7
      %2679 = vperm.xlu0 %2678, %v2670
      %v2680 = vpop.permute.xlu0 %2679
      %2683 = vset.pattern.permute.xlu0 7
      %2684 = vperm.xlu0 %2683, %v2671
      %v2685 = vpop.permute.xlu0 %2684
      %v2687 = vmul.f32 %v2661, %v2675
      %v2688 = vmul.f32 %v2663, %v2680
      %v2689 = vmul.f32 %v2665, %v2685
      %v2690 = vsel %vm2668, %v2661, %v2687
      %v2691 = vsel %vm2668, %v2663, %v2688
      %v2692 = vsel %vm2668, %v2665, %v2689
      %2696 = vrot.lane.b32.xlu0 %v2690, 8
      %v2697 = vpop.permute.xlu0 %2696
      %2698 = vrot.lane.b32.xlu0 %v2691, 8
      %v2699 = vpop.permute.xlu0 %2698
      %2700 = vrot.lane.b32.xlu0 %v2692, 8
      %v2701 = vpop.permute.xlu0 %2700
      %vm2705 = vcmask 64512
      %v2706 = vsel %vm2705, %v2661, %v2697
      %v2707 = vsel %vm2705, %v2663, %v2699
      %v2708 = vsel %vm2705, %v2665, %v2701
      %vm2709 = vcmask 130048
      %2710 = vst.msk [vmem:[%s325] sm:$0xff] %vm2709, %v2706
      %2711 = vst.msk [vmem:[%s325 + $0x8] sm:$0xff] %vm2709, %v2707
      %2712 = vst.msk [vmem:[%s325 + $0x10] sm:$0xff] %vm2709, %v2708
      %p2713 = scmp.lt.s32.totalorder %s19, 1
      %s2714 = scalar_select %p2713, %s19, 1
      %s2715 = smul.addr %s2714, 3
      %s2716 = smul.addr %s2715, 8
      %s2717 = scalar_lea.vmem %s8, %s2716
      // Predicated region
      $region53: #{tpu_custom_call.1} parent=51 // pred_check
        %p2718 = pneg %p215
      $region54: #{tpu_custom_call.1} parent=51 // pred_check_branch
        %2720 = sbr.rel (%p2718) target = $region56
      $region55: #{tpu_custom_call.1} parent=51 // pred_region
        _
      $region56: #{tpu_custom_call.1} parent=51 // pred_fallthru
        _
    $region52: #{tpu_custom_call.1} parent=5 // pred_fallthru
      _
    %p2721 = scmp.le.s32.totalorder 2, %s14
    // Predicated region
    $region57: #{tpu_custom_call.1} parent=5 // pred_check
      %p2722 = pneg %p2721
    $region58: #{tpu_custom_call.1} parent=5 // pred_check_branch
      %2724 = sbr.rel (%p2722) target = $region60
    $region59: #{tpu_custom_call.1} parent=5 // pred_region
      %s2725 = ssub.s32 %s14, 2
      // Predicated region
      $region61: #{tpu_custom_call.1} parent=59 // pred_check
        %p2726 = pneg %p221
      $region62: #{tpu_custom_call.1} parent=59 // pred_check_branch
        %2728 = sbr.rel (%p2726) target = $region64
      $region63: #{tpu_custom_call.1} parent=59 // pred_region
        %p2729 = scmp.lt.s32.totalorder %s20, 1
        %s2730 = scalar_select %p2729, %s20, 1
        %s2731 = smul.addr %s2730, 3
        %s2732 = smul.addr %s2731, 8
        %s2733 = scalar_lea.vmem %s8, %s2732
      $region64: #{tpu_custom_call.1} parent=59 // pred_fallthru
        _
    $region60: #{tpu_custom_call.1} parent=5 // pred_fallthru
      _
  $region6: #{tpu_custom_call.1} parent=0 // loop_footer
    %s18 = sadd.s32 1, %s14
  $region7: #{tpu_custom_call.1} parent=0 // loop_footer_branch
    %13 = sbr.rel target = $region3
  $region8: #{tpu_custom_call.1} parent=0 // loop_exit
    _

</llo_original>
